<compile_context>
chip_gen: v7x
topology: tpu7x:2x2x1
jax: 0.10.0
libtpu: 0.0.40
codegen_flags: <defaults>
</compile_context>

<pallas_src>
import jax
import jax.numpy as jnp
from jax.experimental import pallas as pl
from jax.experimental.pallas import tpu as pltpu

ROWS = 20
COLS = 124
IN_DIM = ROWS * COLS      # 2480 (torch flatten)
H1 = 32
H2 = 16
N_ACT = 6
HEAD_OUT = 8              # 6 logits + 1 value + 1 zero pad (fused head)
TB_MAX = 1024             # max batch rows per grid step


def _round_up(x, m):
    return ((x + m - 1) // m) * m


def _pick_tb(batch):
    """Batch tile: multiple of 8, >=2 grid steps (>=4 for large B), <=TB_MAX."""
    if batch <= 16:
        return _round_up(max(batch, 1), 8)
    target_steps = 4 if batch >= 1024 else 2
    tb = _round_up((batch + target_steps - 1) // target_steps, 8)
    return min(TB_MAX, tb)


def _mlp_kernel(x_ref, w1_ref, b1_ref, w2_ref, b2_ref, wh_ref, bh_ref, out_ref):
    # x tile: (TB, 20, 124) f32 -- exactly the HBM layout of obs.
    # Layer 1: contract over (rows, cols) with 20 accumulated MXU matmuls,
    # never materializing a flattened / padded copy of x.
    acc = jnp.dot(x_ref[:, 0, :], w1_ref[0], preferred_element_type=jnp.float32)
    for r in range(1, ROWS):
        acc = acc + jnp.dot(x_ref[:, r, :], w1_ref[r],
                            preferred_element_type=jnp.float32)
    h1 = jnp.maximum(acc + b1_ref[...], 0.0)                    # (TB, 32)

    h2 = jnp.dot(h1, w2_ref[...], preferred_element_type=jnp.float32)
    h2 = jnp.maximum(h2 + b2_ref[...], 0.0)                     # (TB, 16) features

    out = jnp.dot(h2, wh_ref[...], preferred_element_type=jnp.float32)
    out_ref[...] = out + bh_ref[...]                            # (TB, 8) fused heads


def prepare_params(params):
    """One-time repack of torch-layout params into kernel layout.

    Hoisted out of the per-call path (perf review #6): call once when params
    are created/updated, not every forward.
    """
    # torch Linear stores weight as (out, in); flatten order of (20, 124) means
    # input index k = r*124 + c, so W1^T reshapes cleanly to (20, 124, 32).
    w1 = params["w1"].T.reshape(ROWS, COLS, H1)                  # (20, 124, 32)
    b1 = params["b1"][None, :]                                   # (1, 32)
    w2 = params["w2"].T                                          # (32, 16)
    b2 = params["b2"][None, :]                                   # (1, 16)
    # Fused head: [logits (6) | value (1) | zero pad (1)] -> (16, 8)
    wh = jnp.concatenate(
        [params["wl"], params["wv"], jnp.zeros((1, H2), jnp.float32)], axis=0
    ).T                                                          # (16, 8)
    bh = jnp.concatenate(
        [params["bl"], params["bv"], jnp.zeros((1,), jnp.float32)]
    )[None, :]                                                   # (1, 8)
    return dict(w1=w1, b1=b1, w2=w2, b2=b2, wh=wh, bh=bh)


def custom_model_forward(obs, kparams):
    """obs: (B, 20, 124). Returns (logits (B, 6), value (B,))."""
    B = obs.shape[0]
    x = obs.astype(jnp.float32)          # no-op when obs is already f32

    TB = _pick_tb(B)
    n_tiles = pl.cdiv(B, TB)             # partial final block handles any B

    # VMEM budget: double-buffered x tile (sublane/lane padded 20->24, 124->128)
    # + resident weights + out tile + headroom.  v5e's default scoped limit is
    # 16 MiB, so request explicitly (perf review #5).
    x_block_bytes = TB * 24 * 128 * 4
    w1_block_bytes = ROWS * 128 * 128 * 4
    out_block_bytes = TB * 128 * 4
    needed = 2 * (x_block_bytes + w1_block_bytes + out_block_bytes) + (2 << 20)
    vmem_limit = min(max(needed, 16 << 20), 56 << 20)

    flops = 2 * B * (IN_DIM * H1 + H1 * H2 + H2 * HEAD_OUT)
    bytes_accessed = (B * ROWS * COLS * 4
                      + (IN_DIM * H1 + H1 + H1 * H2 + H2
                         + H2 * HEAD_OUT + HEAD_OUT) * 4
                      + B * HEAD_OUT * 4)

    out = pl.pallas_call(
        _mlp_kernel,
        out_shape=jax.ShapeDtypeStruct((B, HEAD_OUT), jnp.float32),
        grid=(n_tiles,),
        in_specs=[
            pl.BlockSpec((TB, ROWS, COLS), lambda i: (i, 0, 0)),   # x: batch-tiled
            pl.BlockSpec((ROWS, COLS, H1), lambda i: (0, 0, 0)),   # weights/biases:
            pl.BlockSpec((1, H1), lambda i: (0, 0)),               #   resident across
            pl.BlockSpec((H1, H2), lambda i: (0, 0)),              #   grid steps
            pl.BlockSpec((1, H2), lambda i: (0, 0)),
            pl.BlockSpec((H2, HEAD_OUT), lambda i: (0, 0)),
            pl.BlockSpec((1, HEAD_OUT), lambda i: (0, 0)),
        ],
        out_specs=pl.BlockSpec((TB, HEAD_OUT), lambda i: (i, 0)),
        compiler_params=pltpu.CompilerParams(
            dimension_semantics=("parallel",),
            vmem_limit_bytes=vmem_limit,
        ),
        cost_estimate=pl.CostEstimate(
            flops=flops, transcendentals=0, bytes_accessed=bytes_accessed),
    )(x, kparams["w1"], kparams["b1"], kparams["w2"], kparams["b2"],
      kparams["wh"], kparams["bh"])

    logits = out[:, :N_ACT]
    value = out[:, N_ACT]
    return logits, value


def init_params(key):
    """Deterministic synthetic parameters with torch Linear shapes (out, in)."""
    ks = jax.random.split(key, 8)

    def lin(kw, kb, out_d, in_d):
        bound = 1.0 / jnp.sqrt(in_d)
        w = jax.random.uniform(kw, (out_d, in_d), jnp.float32, -bound, bound)
        b = jax.random.uniform(kb, (out_d,), jnp.float32, -bound, bound)
        return w, b

    w1, b1 = lin(ks[0], ks[1], H1, IN_DIM)
    w2, b2 = lin(ks[2], ks[3], H2, H1)
    wl, bl = lin(ks[4], ks[5], N_ACT, H2)
    wv, bv = lin(ks[6], ks[7], 1, H2)
    return dict(w1=w1, b1=b1, w2=w2, b2=b2, wl=wl, bl=bl, wv=wv, bv=bv)


def reference_forward(obs, params):
    """Pure-JAX reference of the PyTorch forward (for correctness check)."""
    B = obs.shape[0]
    x = obs.astype(jnp.float32).reshape(B, IN_DIM)
    h1 = jnp.maximum(x @ params["w1"].T + params["b1"], 0.0)
    h2 = jnp.maximum(h1 @ params["w2"].T + params["b2"], 0.0)
    logits = h2 @ params["wl"].T + params["bl"]
    value = (h2 @ params["wv"].T + params["bv"])[:, 0]
    return logits, value


if __name__ == "__main__":
    key = jax.random.PRNGKey(0)
    k_obs, k_par = jax.random.split(key)

    B = 2
    obs = jax.random.normal(k_obs, (B, ROWS, COLS), dtype=jnp.float32)
    params = init_params(k_par)
    kparams = prepare_params(params)          # one-time weight repack (hoisted)

    forward = jax.jit(custom_model_forward)
    logits, value = forward(obs, kparams)
    jax.block_until_ready((logits, value))

    ref_logits, ref_value = reference_forward(obs, params)
    assert logits.shape == (B, N_ACT) and value.shape == (B,)
    assert jnp.allclose(logits, ref_logits, atol=1e-4, rtol=1e-4)
    assert jnp.allclose(value, ref_value, atol=1e-4, rtol=1e-4)

    print("KERNEL_OK")
</pallas_src>

<mosaic_0001>
module attributes {stable_mosaic.version = 11 : i64} {
  func.func @_mlp_kernel(%arg0: i32, %arg1: memref<8x20x124xf32, #tpu.memory_space<vmem>>, %arg2: memref<20x124x32xf32, #tpu.memory_space<vmem>>, %arg3: memref<1x32xf32, #tpu.memory_space<vmem>>, %arg4: memref<32x16xf32, #tpu.memory_space<vmem>>, %arg5: memref<1x16xf32, #tpu.memory_space<vmem>>, %arg6: memref<16x8xf32, #tpu.memory_space<vmem>>, %arg7: memref<1x8xf32, #tpu.memory_space<vmem>>, %arg8: memref<8x8xf32, #tpu.memory_space<vmem>>) attributes {dimension_semantics = [#tpu.dimension_semantics<parallel>], iteration_bounds = array<i64: 1>, scalar_prefetch = 0 : i64, scratch_operands = 0 : i64, tpu.core_type = #tpu.core_type<tc>, window_params = [{transform_indices = @transform_0, window_bounds = array<i64: 8, 20, 124>}, {pipeline_mode = #tpu.pipeline_mode<synchronous>, transform_indices = @transform_1, window_bounds = array<i64: 20, 124, 32>}, {pipeline_mode = #tpu.pipeline_mode<synchronous>, transform_indices = @transform_2, window_bounds = array<i64: 1, 32>}, {pipeline_mode = #tpu.pipeline_mode<synchronous>, transform_indices = @transform_3, window_bounds = array<i64: 32, 16>}, {pipeline_mode = #tpu.pipeline_mode<synchronous>, transform_indices = @transform_4, window_bounds = array<i64: 1, 16>}, {pipeline_mode = #tpu.pipeline_mode<synchronous>, transform_indices = @transform_5, window_bounds = array<i64: 16, 8>}, {pipeline_mode = #tpu.pipeline_mode<synchronous>, transform_indices = @transform_6, window_bounds = array<i64: 1, 8>}, {transform_indices = @transform_7, window_bounds = array<i64: 8, 8>}]} {
    %c0 = arith.constant 0 : index
    %c0_0 = arith.constant 0 : index
    %c0_1 = arith.constant 0 : index
    %0 = vector.load %arg1[%c0, %c0_0, %c0_1] : memref<8x20x124xf32, #tpu.memory_space<vmem>>, vector<8x1x124xf32>
    %1 = vector.shape_cast %0 : vector<8x1x124xf32> to vector<8x124xf32>
    %c0_2 = arith.constant 0 : index
    %c0_3 = arith.constant 0 : index
    %c0_4 = arith.constant 0 : index
    %2 = vector.load %arg2[%c0_2, %c0_3, %c0_4] : memref<20x124x32xf32, #tpu.memory_space<vmem>>, vector<1x124x32xf32>
    %3 = vector.shape_cast %2 : vector<1x124x32xf32> to vector<124x32xf32>
    %cst = arith.constant dense<0.000000e+00> : vector<8x32xf32>
    %4 = tpu.matmul %1, %3, %cst {dimension_numbers = #tpu.dot_dimension_numbers<[1], [0], [0], [1], [0, 0, 1, 1], [], []>} : vector<8x124xf32>, vector<124x32xf32>, vector<8x32xf32> -> vector<8x32xf32>
    %c0_5 = arith.constant 0 : index
    %c1 = arith.constant 1 : index
    %c0_6 = arith.constant 0 : index
    %5 = vector.load %arg1[%c0_5, %c1, %c0_6] : memref<8x20x124xf32, #tpu.memory_space<vmem>>, vector<8x1x124xf32>
    %6 = vector.shape_cast %5 : vector<8x1x124xf32> to vector<8x124xf32>
    %c1_7 = arith.constant 1 : index
    %c0_8 = arith.constant 0 : index
    %c0_9 = arith.constant 0 : index
    %7 = vector.load %arg2[%c1_7, %c0_8, %c0_9] : memref<20x124x32xf32, #tpu.memory_space<vmem>>, vector<1x124x32xf32>
    %8 = vector.shape_cast %7 : vector<1x124x32xf32> to vector<124x32xf32>
    %cst_10 = arith.constant dense<0.000000e+00> : vector<8x32xf32>
    %9 = tpu.matmul %6, %8, %cst_10 {dimension_numbers = #tpu.dot_dimension_numbers<[1], [0], [0], [1], [0, 0, 1, 1], [], []>} : vector<8x124xf32>, vector<124x32xf32>, vector<8x32xf32> -> vector<8x32xf32>
    %10 = arith.addf %4, %9 : vector<8x32xf32>
    %c0_11 = arith.constant 0 : index
    %c2 = arith.constant 2 : index
    %c0_12 = arith.constant 0 : index
    %11 = vector.load %arg1[%c0_11, %c2, %c0_12] : memref<8x20x124xf32, #tpu.memory_space<vmem>>, vector<8x1x124xf32>
    %12 = vector.shape_cast %11 : vector<8x1x124xf32> to vector<8x124xf32>
    %c2_13 = arith.constant 2 : index
    %c0_14 = arith.constant 0 : index
    %c0_15 = arith.constant 0 : index
    %13 = vector.load %arg2[%c2_13, %c0_14, %c0_15] : memref<20x124x32xf32, #tpu.memory_space<vmem>>, vector<1x124x32xf32>
    %14 = vector.shape_cast %13 : vector<1x124x32xf32> to vector<124x32xf32>
    %cst_16 = arith.constant dense<0.000000e+00> : vector<8x32xf32>
    %15 = tpu.matmul %12, %14, %cst_16 {dimension_numbers = #tpu.dot_dimension_numbers<[1], [0], [0], [1], [0, 0, 1, 1], [], []>} : vector<8x124xf32>, vector<124x32xf32>, vector<8x32xf32> -> vector<8x32xf32>
    %16 = arith.addf %10, %15 : vector<8x32xf32>
    %c0_17 = arith.constant 0 : index
    %c3 = arith.constant 3 : index
    %c0_18 = arith.constant 0 : index
    %17 = vector.load %arg1[%c0_17, %c3, %c0_18] : memref<8x20x124xf32, #tpu.memory_space<vmem>>, vector<8x1x124xf32>
    %18 = vector.shape_cast %17 : vector<8x1x124xf32> to vector<8x124xf32>
    %c3_19 = arith.constant 3 : index
    %c0_20 = arith.constant 0 : index
    %c0_21 = arith.constant 0 : index
    %19 = vector.load %arg2[%c3_19, %c0_20, %c0_21] : memref<20x124x32xf32, #tpu.memory_space<vmem>>, vector<1x124x32xf32>
    %20 = vector.shape_cast %19 : vector<1x124x32xf32> to vector<124x32xf32>
    %cst_22 = arith.constant dense<0.000000e+00> : vector<8x32xf32>
    %21 = tpu.matmul %18, %20, %cst_22 {dimension_numbers = #tpu.dot_dimension_numbers<[1], [0], [0], [1], [0, 0, 1, 1], [], []>} : vector<8x124xf32>, vector<124x32xf32>, vector<8x32xf32> -> vector<8x32xf32>
    %22 = arith.addf %16, %21 : vector<8x32xf32>
    %c0_23 = arith.constant 0 : index
    %c4 = arith.constant 4 : index
    %c0_24 = arith.constant 0 : index
    %23 = vector.load %arg1[%c0_23, %c4, %c0_24] : memref<8x20x124xf32, #tpu.memory_space<vmem>>, vector<8x1x124xf32>
    %24 = vector.shape_cast %23 : vector<8x1x124xf32> to vector<8x124xf32>
    %c4_25 = arith.constant 4 : index
    %c0_26 = arith.constant 0 : index
    %c0_27 = arith.constant 0 : index
    %25 = vector.load %arg2[%c4_25, %c0_26, %c0_27] : memref<20x124x32xf32, #tpu.memory_space<vmem>>, vector<1x124x32xf32>
    %26 = vector.shape_cast %25 : vector<1x124x32xf32> to vector<124x32xf32>
    %cst_28 = arith.constant dense<0.000000e+00> : vector<8x32xf32>
    %27 = tpu.matmul %24, %26, %cst_28 {dimension_numbers = #tpu.dot_dimension_numbers<[1], [0], [0], [1], [0, 0, 1, 1], [], []>} : vector<8x124xf32>, vector<124x32xf32>, vector<8x32xf32> -> vector<8x32xf32>
    %28 = arith.addf %22, %27 : vector<8x32xf32>
    %c0_29 = arith.constant 0 : index
    %c5 = arith.constant 5 : index
    %c0_30 = arith.constant 0 : index
    %29 = vector.load %arg1[%c0_29, %c5, %c0_30] : memref<8x20x124xf32, #tpu.memory_space<vmem>>, vector<8x1x124xf32>
    %30 = vector.shape_cast %29 : vector<8x1x124xf32> to vector<8x124xf32>
    %c5_31 = arith.constant 5 : index
    %c0_32 = arith.constant 0 : index
    %c0_33 = arith.constant 0 : index
    %31 = vector.load %arg2[%c5_31, %c0_32, %c0_33] : memref<20x124x32xf32, #tpu.memory_space<vmem>>, vector<1x124x32xf32>
    %32 = vector.shape_cast %31 : vector<1x124x32xf32> to vector<124x32xf32>
    %cst_34 = arith.constant dense<0.000000e+00> : vector<8x32xf32>
    %33 = tpu.matmul %30, %32, %cst_34 {dimension_numbers = #tpu.dot_dimension_numbers<[1], [0], [0], [1], [0, 0, 1, 1], [], []>} : vector<8x124xf32>, vector<124x32xf32>, vector<8x32xf32> -> vector<8x32xf32>
    %34 = arith.addf %28, %33 : vector<8x32xf32>
    %c0_35 = arith.constant 0 : index
    %c6 = arith.constant 6 : index
    %c0_36 = arith.constant 0 : index
    %35 = vector.load %arg1[%c0_35, %c6, %c0_36] : memref<8x20x124xf32, #tpu.memory_space<vmem>>, vector<8x1x124xf32>
    %36 = vector.shape_cast %35 : vector<8x1x124xf32> to vector<8x124xf32>
    %c6_37 = arith.constant 6 : index
    %c0_38 = arith.constant 0 : index
    %c0_39 = arith.constant 0 : index
    %37 = vector.load %arg2[%c6_37, %c0_38, %c0_39] : memref<20x124x32xf32, #tpu.memory_space<vmem>>, vector<1x124x32xf32>
    %38 = vector.shape_cast %37 : vector<1x124x32xf32> to vector<124x32xf32>
    %cst_40 = arith.constant dense<0.000000e+00> : vector<8x32xf32>
    %39 = tpu.matmul %36, %38, %cst_40 {dimension_numbers = #tpu.dot_dimension_numbers<[1], [0], [0], [1], [0, 0, 1, 1], [], []>} : vector<8x124xf32>, vector<124x32xf32>, vector<8x32xf32> -> vector<8x32xf32>
    %40 = arith.addf %34, %39 : vector<8x32xf32>
    %c0_41 = arith.constant 0 : index
    %c7 = arith.constant 7 : index
    %c0_42 = arith.constant 0 : index
    %41 = vector.load %arg1[%c0_41, %c7, %c0_42] : memref<8x20x124xf32, #tpu.memory_space<vmem>>, vector<8x1x124xf32>
    %42 = vector.shape_cast %41 : vector<8x1x124xf32> to vector<8x124xf32>
    %c7_43 = arith.constant 7 : index
    %c0_44 = arith.constant 0 : index
    %c0_45 = arith.constant 0 : index
    %43 = vector.load %arg2[%c7_43, %c0_44, %c0_45] : memref<20x124x32xf32, #tpu.memory_space<vmem>>, vector<1x124x32xf32>
    %44 = vector.shape_cast %43 : vector<1x124x32xf32> to vector<124x32xf32>
    %cst_46 = arith.constant dense<0.000000e+00> : vector<8x32xf32>
    %45 = tpu.matmul %42, %44, %cst_46 {dimension_numbers = #tpu.dot_dimension_numbers<[1], [0], [0], [1], [0, 0, 1, 1], [], []>} : vector<8x124xf32>, vector<124x32xf32>, vector<8x32xf32> -> vector<8x32xf32>
    %46 = arith.addf %40, %45 : vector<8x32xf32>
    %c0_47 = arith.constant 0 : index
    %c8 = arith.constant 8 : index
    %c0_48 = arith.constant 0 : index
    %47 = vector.load %arg1[%c0_47, %c8, %c0_48] : memref<8x20x124xf32, #tpu.memory_space<vmem>>, vector<8x1x124xf32>
    %48 = vector.shape_cast %47 : vector<8x1x124xf32> to vector<8x124xf32>
    %c8_49 = arith.constant 8 : index
    %c0_50 = arith.constant 0 : index
    %c0_51 = arith.constant 0 : index
    %49 = vector.load %arg2[%c8_49, %c0_50, %c0_51] : memref<20x124x32xf32, #tpu.memory_space<vmem>>, vector<1x124x32xf32>
    %50 = vector.shape_cast %49 : vector<1x124x32xf32> to vector<124x32xf32>
    %cst_52 = arith.constant dense<0.000000e+00> : vector<8x32xf32>
    %51 = tpu.matmul %48, %50, %cst_52 {dimension_numbers = #tpu.dot_dimension_numbers<[1], [0], [0], [1], [0, 0, 1, 1], [], []>} : vector<8x124xf32>, vector<124x32xf32>, vector<8x32xf32> -> vector<8x32xf32>
    %52 = arith.addf %46, %51 : vector<8x32xf32>
    %c0_53 = arith.constant 0 : index
    %c9 = arith.constant 9 : index
    %c0_54 = arith.constant 0 : index
    %53 = vector.load %arg1[%c0_53, %c9, %c0_54] : memref<8x20x124xf32, #tpu.memory_space<vmem>>, vector<8x1x124xf32>
    %54 = vector.shape_cast %53 : vector<8x1x124xf32> to vector<8x124xf32>
    %c9_55 = arith.constant 9 : index
    %c0_56 = arith.constant 0 : index
    %c0_57 = arith.constant 0 : index
    %55 = vector.load %arg2[%c9_55, %c0_56, %c0_57] : memref<20x124x32xf32, #tpu.memory_space<vmem>>, vector<1x124x32xf32>
    %56 = vector.shape_cast %55 : vector<1x124x32xf32> to vector<124x32xf32>
    %cst_58 = arith.constant dense<0.000000e+00> : vector<8x32xf32>
    %57 = tpu.matmul %54, %56, %cst_58 {dimension_numbers = #tpu.dot_dimension_numbers<[1], [0], [0], [1], [0, 0, 1, 1], [], []>} : vector<8x124xf32>, vector<124x32xf32>, vector<8x32xf32> -> vector<8x32xf32>
    %58 = arith.addf %52, %57 : vector<8x32xf32>
    %c0_59 = arith.constant 0 : index
    %c10 = arith.constant 10 : index
    %c0_60 = arith.constant 0 : index
    %59 = vector.load %arg1[%c0_59, %c10, %c0_60] : memref<8x20x124xf32, #tpu.memory_space<vmem>>, vector<8x1x124xf32>
    %60 = vector.shape_cast %59 : vector<8x1x124xf32> to vector<8x124xf32>
    %c10_61 = arith.constant 10 : index
    %c0_62 = arith.constant 0 : index
    %c0_63 = arith.constant 0 : index
    %61 = vector.load %arg2[%c10_61, %c0_62, %c0_63] : memref<20x124x32xf32, #tpu.memory_space<vmem>>, vector<1x124x32xf32>
    %62 = vector.shape_cast %61 : vector<1x124x32xf32> to vector<124x32xf32>
    %cst_64 = arith.constant dense<0.000000e+00> : vector<8x32xf32>
    %63 = tpu.matmul %60, %62, %cst_64 {dimension_numbers = #tpu.dot_dimension_numbers<[1], [0], [0], [1], [0, 0, 1, 1], [], []>} : vector<8x124xf32>, vector<124x32xf32>, vector<8x32xf32> -> vector<8x32xf32>
    %64 = arith.addf %58, %63 : vector<8x32xf32>
    %c0_65 = arith.constant 0 : index
    %c11 = arith.constant 11 : index
    %c0_66 = arith.constant 0 : index
    %65 = vector.load %arg1[%c0_65, %c11, %c0_66] : memref<8x20x124xf32, #tpu.memory_space<vmem>>, vector<8x1x124xf32>
    %66 = vector.shape_cast %65 : vector<8x1x124xf32> to vector<8x124xf32>
    %c11_67 = arith.constant 11 : index
    %c0_68 = arith.constant 0 : index
    %c0_69 = arith.constant 0 : index
    %67 = vector.load %arg2[%c11_67, %c0_68, %c0_69] : memref<20x124x32xf32, #tpu.memory_space<vmem>>, vector<1x124x32xf32>
    %68 = vector.shape_cast %67 : vector<1x124x32xf32> to vector<124x32xf32>
    %cst_70 = arith.constant dense<0.000000e+00> : vector<8x32xf32>
    %69 = tpu.matmul %66, %68, %cst_70 {dimension_numbers = #tpu.dot_dimension_numbers<[1], [0], [0], [1], [0, 0, 1, 1], [], []>} : vector<8x124xf32>, vector<124x32xf32>, vector<8x32xf32> -> vector<8x32xf32>
    %70 = arith.addf %64, %69 : vector<8x32xf32>
    %c0_71 = arith.constant 0 : index
    %c12 = arith.constant 12 : index
    %c0_72 = arith.constant 0 : index
    %71 = vector.load %arg1[%c0_71, %c12, %c0_72] : memref<8x20x124xf32, #tpu.memory_space<vmem>>, vector<8x1x124xf32>
    %72 = vector.shape_cast %71 : vector<8x1x124xf32> to vector<8x124xf32>
    %c12_73 = arith.constant 12 : index
    %c0_74 = arith.constant 0 : index
    %c0_75 = arith.constant 0 : index
    %73 = vector.load %arg2[%c12_73, %c0_74, %c0_75] : memref<20x124x32xf32, #tpu.memory_space<vmem>>, vector<1x124x32xf32>
    %74 = vector.shape_cast %73 : vector<1x124x32xf32> to vector<124x32xf32>
    %cst_76 = arith.constant dense<0.000000e+00> : vector<8x32xf32>
    %75 = tpu.matmul %72, %74, %cst_76 {dimension_numbers = #tpu.dot_dimension_numbers<[1], [0], [0], [1], [0, 0, 1, 1], [], []>} : vector<8x124xf32>, vector<124x32xf32>, vector<8x32xf32> -> vector<8x32xf32>
    %76 = arith.addf %70, %75 : vector<8x32xf32>
    %c0_77 = arith.constant 0 : index
    %c13 = arith.constant 13 : index
    %c0_78 = arith.constant 0 : index
    %77 = vector.load %arg1[%c0_77, %c13, %c0_78] : memref<8x20x124xf32, #tpu.memory_space<vmem>>, vector<8x1x124xf32>
    %78 = vector.shape_cast %77 : vector<8x1x124xf32> to vector<8x124xf32>
    %c13_79 = arith.constant 13 : index
    %c0_80 = arith.constant 0 : index
    %c0_81 = arith.constant 0 : index
    %79 = vector.load %arg2[%c13_79, %c0_80, %c0_81] : memref<20x124x32xf32, #tpu.memory_space<vmem>>, vector<1x124x32xf32>
    %80 = vector.shape_cast %79 : vector<1x124x32xf32> to vector<124x32xf32>
    %cst_82 = arith.constant dense<0.000000e+00> : vector<8x32xf32>
    %81 = tpu.matmul %78, %80, %cst_82 {dimension_numbers = #tpu.dot_dimension_numbers<[1], [0], [0], [1], [0, 0, 1, 1], [], []>} : vector<8x124xf32>, vector<124x32xf32>, vector<8x32xf32> -> vector<8x32xf32>
    %82 = arith.addf %76, %81 : vector<8x32xf32>
    %c0_83 = arith.constant 0 : index
    %c14 = arith.constant 14 : index
    %c0_84 = arith.constant 0 : index
    %83 = vector.load %arg1[%c0_83, %c14, %c0_84] : memref<8x20x124xf32, #tpu.memory_space<vmem>>, vector<8x1x124xf32>
    %84 = vector.shape_cast %83 : vector<8x1x124xf32> to vector<8x124xf32>
    %c14_85 = arith.constant 14 : index
    %c0_86 = arith.constant 0 : index
    %c0_87 = arith.constant 0 : index
    %85 = vector.load %arg2[%c14_85, %c0_86, %c0_87] : memref<20x124x32xf32, #tpu.memory_space<vmem>>, vector<1x124x32xf32>
    %86 = vector.shape_cast %85 : vector<1x124x32xf32> to vector<124x32xf32>
    %cst_88 = arith.constant dense<0.000000e+00> : vector<8x32xf32>
    %87 = tpu.matmul %84, %86, %cst_88 {dimension_numbers = #tpu.dot_dimension_numbers<[1], [0], [0], [1], [0, 0, 1, 1], [], []>} : vector<8x124xf32>, vector<124x32xf32>, vector<8x32xf32> -> vector<8x32xf32>
    %88 = arith.addf %82, %87 : vector<8x32xf32>
    %c0_89 = arith.constant 0 : index
    %c15 = arith.constant 15 : index
    %c0_90 = arith.constant 0 : index
    %89 = vector.load %arg1[%c0_89, %c15, %c0_90] : memref<8x20x124xf32, #tpu.memory_space<vmem>>, vector<8x1x124xf32>
    %90 = vector.shape_cast %89 : vector<8x1x124xf32> to vector<8x124xf32>
    %c15_91 = arith.constant 15 : index
    %c0_92 = arith.constant 0 : index
    %c0_93 = arith.constant 0 : index
    %91 = vector.load %arg2[%c15_91, %c0_92, %c0_93] : memref<20x124x32xf32, #tpu.memory_space<vmem>>, vector<1x124x32xf32>
    %92 = vector.shape_cast %91 : vector<1x124x32xf32> to vector<124x32xf32>
    %cst_94 = arith.constant dense<0.000000e+00> : vector<8x32xf32>
    %93 = tpu.matmul %90, %92, %cst_94 {dimension_numbers = #tpu.dot_dimension_numbers<[1], [0], [0], [1], [0, 0, 1, 1], [], []>} : vector<8x124xf32>, vector<124x32xf32>, vector<8x32xf32> -> vector<8x32xf32>
    %94 = arith.addf %88, %93 : vector<8x32xf32>
    %c0_95 = arith.constant 0 : index
    %c16 = arith.constant 16 : index
    %c0_96 = arith.constant 0 : index
    %95 = vector.load %arg1[%c0_95, %c16, %c0_96] : memref<8x20x124xf32, #tpu.memory_space<vmem>>, vector<8x1x124xf32>
    %96 = vector.shape_cast %95 : vector<8x1x124xf32> to vector<8x124xf32>
    %c16_97 = arith.constant 16 : index
    %c0_98 = arith.constant 0 : index
    %c0_99 = arith.constant 0 : index
    %97 = vector.load %arg2[%c16_97, %c0_98, %c0_99] : memref<20x124x32xf32, #tpu.memory_space<vmem>>, vector<1x124x32xf32>
    %98 = vector.shape_cast %97 : vector<1x124x32xf32> to vector<124x32xf32>
    %cst_100 = arith.constant dense<0.000000e+00> : vector<8x32xf32>
    %99 = tpu.matmul %96, %98, %cst_100 {dimension_numbers = #tpu.dot_dimension_numbers<[1], [0], [0], [1], [0, 0, 1, 1], [], []>} : vector<8x124xf32>, vector<124x32xf32>, vector<8x32xf32> -> vector<8x32xf32>
    %100 = arith.addf %94, %99 : vector<8x32xf32>
    %c0_101 = arith.constant 0 : index
    %c17 = arith.constant 17 : index
    %c0_102 = arith.constant 0 : index
    %101 = vector.load %arg1[%c0_101, %c17, %c0_102] : memref<8x20x124xf32, #tpu.memory_space<vmem>>, vector<8x1x124xf32>
    %102 = vector.shape_cast %101 : vector<8x1x124xf32> to vector<8x124xf32>
    %c17_103 = arith.constant 17 : index
    %c0_104 = arith.constant 0 : index
    %c0_105 = arith.constant 0 : index
    %103 = vector.load %arg2[%c17_103, %c0_104, %c0_105] : memref<20x124x32xf32, #tpu.memory_space<vmem>>, vector<1x124x32xf32>
    %104 = vector.shape_cast %103 : vector<1x124x32xf32> to vector<124x32xf32>
    %cst_106 = arith.constant dense<0.000000e+00> : vector<8x32xf32>
    %105 = tpu.matmul %102, %104, %cst_106 {dimension_numbers = #tpu.dot_dimension_numbers<[1], [0], [0], [1], [0, 0, 1, 1], [], []>} : vector<8x124xf32>, vector<124x32xf32>, vector<8x32xf32> -> vector<8x32xf32>
    %106 = arith.addf %100, %105 : vector<8x32xf32>
    %c0_107 = arith.constant 0 : index
    %c18 = arith.constant 18 : index
    %c0_108 = arith.constant 0 : index
    %107 = vector.load %arg1[%c0_107, %c18, %c0_108] : memref<8x20x124xf32, #tpu.memory_space<vmem>>, vector<8x1x124xf32>
    %108 = vector.shape_cast %107 : vector<8x1x124xf32> to vector<8x124xf32>
    %c18_109 = arith.constant 18 : index
    %c0_110 = arith.constant 0 : index
    %c0_111 = arith.constant 0 : index
    %109 = vector.load %arg2[%c18_109, %c0_110, %c0_111] : memref<20x124x32xf32, #tpu.memory_space<vmem>>, vector<1x124x32xf32>
    %110 = vector.shape_cast %109 : vector<1x124x32xf32> to vector<124x32xf32>
    %cst_112 = arith.constant dense<0.000000e+00> : vector<8x32xf32>
    %111 = tpu.matmul %108, %110, %cst_112 {dimension_numbers = #tpu.dot_dimension_numbers<[1], [0], [0], [1], [0, 0, 1, 1], [], []>} : vector<8x124xf32>, vector<124x32xf32>, vector<8x32xf32> -> vector<8x32xf32>
    %112 = arith.addf %106, %111 : vector<8x32xf32>
    %c0_113 = arith.constant 0 : index
    %c19 = arith.constant 19 : index
    %c0_114 = arith.constant 0 : index
    %113 = vector.load %arg1[%c0_113, %c19, %c0_114] : memref<8x20x124xf32, #tpu.memory_space<vmem>>, vector<8x1x124xf32>
    %114 = vector.shape_cast %113 : vector<8x1x124xf32> to vector<8x124xf32>
    %c19_115 = arith.constant 19 : index
    %c0_116 = arith.constant 0 : index
    %c0_117 = arith.constant 0 : index
    %115 = vector.load %arg2[%c19_115, %c0_116, %c0_117] : memref<20x124x32xf32, #tpu.memory_space<vmem>>, vector<1x124x32xf32>
    %116 = vector.shape_cast %115 : vector<1x124x32xf32> to vector<124x32xf32>
    %cst_118 = arith.constant dense<0.000000e+00> : vector<8x32xf32>
    %117 = tpu.matmul %114, %116, %cst_118 {dimension_numbers = #tpu.dot_dimension_numbers<[1], [0], [0], [1], [0, 0, 1, 1], [], []>} : vector<8x124xf32>, vector<124x32xf32>, vector<8x32xf32> -> vector<8x32xf32>
    %118 = arith.addf %112, %117 : vector<8x32xf32>
    %c0_119 = arith.constant 0 : index
    %c0_120 = arith.constant 0 : index
    %119 = vector.load %arg3[%c0_119, %c0_120] : memref<1x32xf32, #tpu.memory_space<vmem>>, vector<1x32xf32>
    %120 = vector.broadcast %119 : vector<1x32xf32> to vector<8x32xf32>
    %121 = arith.addf %118, %120 : vector<8x32xf32>
    %cst_121 = arith.constant 0.000000e+00 : f32
    %122 = vector.broadcast %cst_121 : f32 to vector<8x32xf32>
    %123 = arith.maximumf %121, %122 : vector<8x32xf32>
    %c0_122 = arith.constant 0 : index
    %c0_123 = arith.constant 0 : index
    %124 = vector.load %arg4[%c0_122, %c0_123] : memref<32x16xf32, #tpu.memory_space<vmem>>, vector<32x16xf32>
    %cst_124 = arith.constant dense<0.000000e+00> : vector<8x16xf32>
    %125 = tpu.matmul %123, %124, %cst_124 {dimension_numbers = #tpu.dot_dimension_numbers<[1], [0], [0], [1], [0, 0, 1, 1], [], []>} : vector<8x32xf32>, vector<32x16xf32>, vector<8x16xf32> -> vector<8x16xf32>
    %c0_125 = arith.constant 0 : index
    %c0_126 = arith.constant 0 : index
    %126 = vector.load %arg5[%c0_125, %c0_126] : memref<1x16xf32, #tpu.memory_space<vmem>>, vector<1x16xf32>
    %127 = vector.broadcast %126 : vector<1x16xf32> to vector<8x16xf32>
    %128 = arith.addf %125, %127 : vector<8x16xf32>
    %cst_127 = arith.constant 0.000000e+00 : f32
    %129 = vector.broadcast %cst_127 : f32 to vector<8x16xf32>
    %130 = arith.maximumf %128, %129 : vector<8x16xf32>
    %c0_128 = arith.constant 0 : index
    %c0_129 = arith.constant 0 : index
    %131 = vector.load %arg6[%c0_128, %c0_129] : memref<16x8xf32, #tpu.memory_space<vmem>>, vector<16x8xf32>
    %cst_130 = arith.constant dense<0.000000e+00> : vector<8x8xf32>
    %132 = tpu.matmul %130, %131, %cst_130 {dimension_numbers = #tpu.dot_dimension_numbers<[1], [0], [0], [1], [0, 0, 1, 1], [], []>} : vector<8x16xf32>, vector<16x8xf32>, vector<8x8xf32> -> vector<8x8xf32>
    %c0_131 = arith.constant 0 : index
    %c0_132 = arith.constant 0 : index
    %133 = vector.load %arg7[%c0_131, %c0_132] : memref<1x8xf32, #tpu.memory_space<vmem>>, vector<1x8xf32>
    %134 = vector.broadcast %133 : vector<1x8xf32> to vector<8x8xf32>
    %135 = arith.addf %132, %134 : vector<8x8xf32>
    %c0_133 = arith.constant 0 : index
    %c0_134 = arith.constant 0 : index
    %136 = vector.load %arg8[%c0_133, %c0_134] : memref<8x8xf32, #tpu.memory_space<vmem>>, vector<8x8xf32>
    tpu.vector_store %arg8[%c0_133, %c0_134], %135 {strides = array<i32>} : memref<8x8xf32, #tpu.memory_space<vmem>>, vector<8x8xf32>,
    return
  }
  func.func @transform_0(%arg0: i32) -> (i32, i32, i32) {
    %c0_i32 = arith.constant 0 : i32
    %c0_i32_0 = arith.constant 0 : i32
    %c0_i32_1 = arith.constant 0 : i32
    return %arg0, %c0_i32, %c0_i32_0 : i32, i32, i32
  }
  func.func @transform_1(%arg0: i32) -> (i32, i32, i32) {
    %c0_i32 = arith.constant 0 : i32
    %c0_i32_0 = arith.constant 0 : i32
    %c0_i32_1 = arith.constant 0 : i32
    %c0_i32_2 = arith.constant 0 : i32
    return %c0_i32, %c0_i32_0, %c0_i32_1 : i32, i32, i32
  }
  func.func @transform_2(%arg0: i32) -> (i32, i32) {
    %c0_i32 = arith.constant 0 : i32
    %c0_i32_0 = arith.constant 0 : i32
    %c0_i32_1 = arith.constant 0 : i32
    return %c0_i32, %c0_i32_0 : i32, i32
  }
  func.func @transform_3(%arg0: i32) -> (i32, i32) {
    %c0_i32 = arith.constant 0 : i32
    %c0_i32_0 = arith.constant 0 : i32
    %c0_i32_1 = arith.constant 0 : i32
    return %c0_i32, %c0_i32_0 : i32, i32
  }
  func.func @transform_4(%arg0: i32) -> (i32, i32) {
    %c0_i32 = arith.constant 0 : i32
    %c0_i32_0 = arith.constant 0 : i32
    %c0_i32_1 = arith.constant 0 : i32
    return %c0_i32, %c0_i32_0 : i32, i32
  }
  func.func @transform_5(%arg0: i32) -> (i32, i32) {
    %c0_i32 = arith.constant 0 : i32
    %c0_i32_0 = arith.constant 0 : i32
    %c0_i32_1 = arith.constant 0 : i32
    return %c0_i32, %c0_i32_0 : i32, i32
  }
  func.func @transform_6(%arg0: i32) -> (i32, i32) {
    %c0_i32 = arith.constant 0 : i32
    %c0_i32_0 = arith.constant 0 : i32
    %c0_i32_1 = arith.constant 0 : i32
    return %c0_i32, %c0_i32_0 : i32, i32
  }
  func.func @transform_7(%arg0: i32) -> (i32, i32) {
    %c0_i32 = arith.constant 0 : i32
    %c0_i32_0 = arith.constant 0 : i32
    return %arg0, %c0_i32 : i32, i32
  }
}

</mosaic_0001>

<llo_original>
// kernel: custom_model_forward.1
$region0: #{custom_model_forward.1}
  #allocation0 [shape = 'u32[]', space=smem, size = 0x4, offset = 0x4, fixed_abs, tag = 'smem constant byte address 0x4 - core index']
  #allocation1 [shape = 'u32[144,128]{1,0:T(1,128)}', space=vmem, size = 0x12000, scoped, tag = 'internal scratch']
  %s0 = inlined_call_operand.vmem [shape: f32[2,20,124], index: 0, kind: input, shape index: {}]
  %s1 = inlined_call_operand.vmem [shape: f32[20,124,32], index: 1, kind: input, shape index: {}]
  %s2 = inlined_call_operand.vmem [shape: f32[1,32], index: 2, kind: input, shape index: {}]
  %s3 = inlined_call_operand.vmem [shape: f32[32,16], index: 3, kind: input, shape index: {}]
  %s4 = inlined_call_operand.vmem [shape: f32[1,16], index: 4, kind: input, shape index: {}]
  %s5 = inlined_call_operand.vmem [shape: f32[16,8], index: 5, kind: input, shape index: {}]
  %s6 = inlined_call_operand.vmem [shape: f32[1,8], index: 6, kind: input, shape index: {}]
  %s7 = inlined_call_operand.vmem [shape: f32[2,8], index: 7, kind: output, shape index: {}]
  %s8 = sld [smem:[#allocation0]]
  $region68: #{custom_model_forward.1} parent=0
    _
  %s10 = ssub.s32 1, %s8
  %s11 = scalar_select 0, %s10, %s8
  $region1: #{custom_model_forward.1} parent=0
    #allocation2 [shape = 'u8[4096]{0}', space=vmem, size = 0x1000, scoped, tag = 'output window, operand 0, single buffered']
    // Predicated region
    $region2: #{custom_model_forward.1} parent=1 // pred_check
      _
    $region3: #{custom_model_forward.1} parent=1 // pred_check_branch
      %13 = sbr.rel (0) target = $region5
    $region4: #{custom_model_forward.1} parent=1 // pred_region
      _
    $region5: #{custom_model_forward.1} parent=1 // pred_fallthru
      _
    // Predicated region
    $region6: #{custom_model_forward.1} parent=1 // pred_check
      _
    $region7: #{custom_model_forward.1} parent=1 // pred_check_branch
      %15 = sbr.rel (0) target = $region9
    $region8: #{custom_model_forward.1} parent=1 // pred_region
      _
    $region9: #{custom_model_forward.1} parent=1 // pred_fallthru
      _
    // Predicated region
    $region10: #{custom_model_forward.1} parent=1 // pred_check
      _
    $region11: #{custom_model_forward.1} parent=1 // pred_check_branch
      %17 = sbr.rel (0) target = $region13
    $region12: #{custom_model_forward.1} parent=1 // pred_region
      _
    $region13: #{custom_model_forward.1} parent=1 // pred_fallthru
      _
    // Predicated region
    $region14: #{custom_model_forward.1} parent=1 // pred_check
      _
    $region15: #{custom_model_forward.1} parent=1 // pred_check_branch
      %19 = sbr.rel (0) target = $region17
    $region16: #{custom_model_forward.1} parent=1 // pred_region
      _
    $region17: #{custom_model_forward.1} parent=1 // pred_fallthru
      _
    // Predicated region
    $region18: #{custom_model_forward.1} parent=1 // pred_check
      _
    $region19: #{custom_model_forward.1} parent=1 // pred_check_branch
      %21 = sbr.rel (0) target = $region21
    $region20: #{custom_model_forward.1} parent=1 // pred_region
      _
    $region21: #{custom_model_forward.1} parent=1 // pred_fallthru
      _
    // Predicated region
    $region22: #{custom_model_forward.1} parent=1 // pred_check
      _
    $region23: #{custom_model_forward.1} parent=1 // pred_check_branch
      %23 = sbr.rel (0) target = $region25
    $region24: #{custom_model_forward.1} parent=1 // pred_region
      _
    $region25: #{custom_model_forward.1} parent=1 // pred_fallthru
      _
    // Predicated region
    $region26: #{custom_model_forward.1} parent=1 // pred_check
      _
    $region27: #{custom_model_forward.1} parent=1 // pred_check_branch
      %25 = sbr.rel (0) target = $region29
    $region28: #{custom_model_forward.1} parent=1 // pred_region
      _
    $region29: #{custom_model_forward.1} parent=1 // pred_fallthru
      _
    %v26 = vld [vmem:[%s0] sm:$0x1]
    %v27 = vld [vmem:[%s0 + $0x18] sm:$0x1]
    %v28 = vld [vmem:[%s0 + $0x30] sm:$0x1]
    %v29 = vld [vmem:[%s0 + $0x48] sm:$0x1]
    %v30 = vld [vmem:[%s0 + $0x60] sm:$0x1]
    %v31 = vld [vmem:[%s0 + $0x78] sm:$0x1]
    %v32 = vld [vmem:[%s0 + $0x90] sm:$0x1]
    %v33 = vld [vmem:[%s0 + $0xa8] sm:$0x1]
    %v34 = vld [vmem:[%s1] sm:$0xff]
    %v35 = vld [vmem:[%s1 + $0x8] sm:$0xff]
    %v36 = vld [vmem:[%s1 + $0x10] sm:$0xff]
    %v37 = vld [vmem:[%s1 + $0x18] sm:$0xff]
    %v38 = vld [vmem:[%s1 + $0x20] sm:$0xff]
    %v39 = vld [vmem:[%s1 + $0x28] sm:$0xff]
    %v40 = vld [vmem:[%s1 + $0x30] sm:$0xff]
    %v41 = vld [vmem:[%s1 + $0x38] sm:$0xff]
    %v42 = vld [vmem:[%s1 + $0x40] sm:$0xff]
    %v43 = vld [vmem:[%s1 + $0x48] sm:$0xff]
    %v44 = vld [vmem:[%s1 + $0x50] sm:$0xff]
    %v45 = vld [vmem:[%s1 + $0x58] sm:$0xff]
    %v46 = vld [vmem:[%s1 + $0x60] sm:$0xff]
    %v47 = vld [vmem:[%s1 + $0x68] sm:$0xff]
    %v48 = vld [vmem:[%s1 + $0x70] sm:$0xff]
    %v49 = vld [vmem:[%s1 + $0x78] sm:$0xf]
    %v50 = vld [vmem:[%s0 + $0x1] sm:$0x1]
    %v51 = vld [vmem:[%s0 + $0x19] sm:$0x1]
    %v52 = vld [vmem:[%s0 + $0x31] sm:$0x1]
    %v53 = vld [vmem:[%s0 + $0x49] sm:$0x1]
    %v54 = vld [vmem:[%s0 + $0x61] sm:$0x1]
    %v55 = vld [vmem:[%s0 + $0x79] sm:$0x1]
    %v56 = vld [vmem:[%s0 + $0x91] sm:$0x1]
    %v57 = vld [vmem:[%s0 + $0xa9] sm:$0x1]
    %s58 = scalar_lea.vmem %s1, 128
    %v59 = vld [vmem:[%s58] sm:$0xff]
    %v60 = vld [vmem:[%s58 + $0x8] sm:$0xff]
    %v61 = vld [vmem:[%s58 + $0x10] sm:$0xff]
    %v62 = vld [vmem:[%s58 + $0x18] sm:$0xff]
    %v63 = vld [vmem:[%s58 + $0x20] sm:$0xff]
    %v64 = vld [vmem:[%s58 + $0x28] sm:$0xff]
    %v65 = vld [vmem:[%s58 + $0x30] sm:$0xff]
    %v66 = vld [vmem:[%s58 + $0x38] sm:$0xff]
    %v67 = vld [vmem:[%s58 + $0x40] sm:$0xff]
    %v68 = vld [vmem:[%s58 + $0x48] sm:$0xff]
    %v69 = vld [vmem:[%s58 + $0x50] sm:$0xff]
    %v70 = vld [vmem:[%s58 + $0x58] sm:$0xff]
    %v71 = vld [vmem:[%s58 + $0x60] sm:$0xff]
    %v72 = vld [vmem:[%s58 + $0x68] sm:$0xff]
    %v73 = vld [vmem:[%s58 + $0x70] sm:$0xff]
    %v74 = vld [vmem:[%s58 + $0x78] sm:$0xf]
    %v83 = vrot.slane %v51, 7
    %vm84 = vcmask 1041409
    %v85 = vsel %vm84, %v83, %v50
    %v86 = vrot.slane %v52, 6
    %vm87 = vcmask 1042434
    %v88 = vsel %vm87, %v86, %v85
    %v89 = vrot.slane %v53, 5
    %vm90 = vcmask 1043459
    %v91 = vsel %vm90, %v89, %v88
    %v92 = vrot.slane %v54, 4
    %vm93 = vcmask 1044484
    %v94 = vsel %vm93, %v92, %v91
    %v95 = vrot.slane %v55, 3
    %vm96 = vcmask 1045509
    %v97 = vsel %vm96, %v95, %v94
    %v98 = vrot.slane %v56, 2
    %vm99 = vcmask 1046534
    %v100 = vsel %vm99, %v98, %v97
    %v101 = vrot.slane %v57, 1
    %vm102 = vcmask 1047559
    %v103 = vsel %vm102, %v101, %v100
    %vm104 = vcmask 1014784
    %v105 = vsel %vm104, %v103, 0
    %vm107 = vcmask 1043456
    %v109 = vsel %vm107, %v74, 0
    %111 = vmatprep.subr.mxu0 0.0
    %112 = vmatpush1.msra.mxu0 %v59
    %113 = vmatprep.subr.mxu0 0.0
    %114 = vmatpush1.msra.mxu0 %v60
    %115 = vmatprep.subr.mxu0 0.0
    %116 = vmatpush1.msra.mxu0 %v61
    %117 = vmatprep.subr.mxu0 0.0
    %118 = vmatpush1.msra.mxu0 %v62
    %119 = vmatprep.subr.mxu0 0.0
    %120 = vmatpush1.msra.mxu0 %v63
    %121 = vmatprep.subr.mxu0 0.0
    %122 = vmatpush1.msra.mxu0 %v64
    %123 = vmatprep.subr.mxu0 0.0
    %124 = vmatpush1.msra.mxu0 %v65
    %125 = vmatprep.subr.mxu0 0.0
    %126 = vmatpush1.msra.mxu0 %v66
    %127 = vmatprep.subr.mxu0 0.0
    %128 = vmatpush1.msra.mxu0 %v67
    %129 = vmatprep.subr.mxu0 0.0
    %130 = vmatpush1.msra.mxu0 %v68
    %131 = vmatprep.subr.mxu0 0.0
    %132 = vmatpush1.msra.mxu0 %v69
    %133 = vmatprep.subr.mxu0 0.0
    %134 = vmatpush1.msra.mxu0 %v70
    %135 = vmatprep.subr.mxu0 0.0
    %136 = vmatpush1.msra.mxu0 %v71
    %137 = vmatprep.subr.mxu0 0.0
    %138 = vmatpush1.msra.mxu0 %v72
    %139 = vmatprep.subr.mxu0 0.0
    %140 = vmatpush1.msra.mxu0 %v73
    %141 = vmatprep.subr.mxu0 0.0
    %142 = vmatpush1.msra.mxu0 %v109
    %143 = vmatprep.subr.mxu0 0.0
    %144 = vmatpush1.msra.mxu0 0.0
    %145 = vmatprep.subr.mxu0 0.0
    %146 = vmatpush1.msra.mxu0 0.0
    %147 = vmatprep.subr.mxu0 0.0
    %148 = vmatpush1.msra.mxu0 0.0
    %149 = vmatprep.subr.mxu0 0.0
    %150 = vmatpush1.msra.mxu0 0.0
    %151 = vmatprep.subr.mxu0 0.0
    %152 = vmatpush1.msra.mxu0 0.0
    %153 = vmatprep.subr.mxu0 0.0
    %154 = vmatpush1.msra.mxu0 0.0
    %155 = vmatprep.subr.mxu0 0.0
    %156 = vmatpush1.msra.mxu0 0.0
    %157 = vmatprep.subr.mxu0 0.0
    %158 = vmatpush1.msra.mxu0 0.0
    %159 = vmatprep.subr.mxu0 0.0
    %160 = vmatpush1.msra.mxu0 0.0
    %161 = vmatprep.subr.mxu0 0.0
    %162 = vmatpush1.msra.mxu0 0.0
    %163 = vmatprep.subr.mxu0 0.0
    %164 = vmatpush1.msra.mxu0 0.0
    %165 = vmatprep.subr.mxu0 0.0
    %166 = vmatpush1.msra.mxu0 0.0
    %167 = vmatprep.subr.mxu0 0.0
    %168 = vmatpush1.msra.mxu0 0.0
    %169 = vmatprep.subr.mxu0 0.0
    %170 = vmatpush1.msra.mxu0 0.0
    %171 = vmatprep.subr.mxu0 0.0
    %172 = vmatpush1.msra.mxu0 0.0
    %173 = vmatprep.subr.mxu0 0.0
    %174 = vmatpush1.msra.mxu0 0.0
    %175 = vmatprep.mubr.f32.mxu0 0.0
    %176 = vmatmul.mubr.f32.gmra.mrb[0].mxu0 %v105
    %v177 = vpop.f32.mrb[0].mxu0
    %v178 = vadd.f32 0.0, %v177
    %v179 = vpop.f32.mrb[0].mxu0
    %180 = vdwg.mxu0
    %v189 = vrot.slane %v27, 7
    %v190 = vsel %vm84, %v189, %v26
    %v191 = vrot.slane %v28, 6
    %v192 = vsel %vm87, %v191, %v190
    %v193 = vrot.slane %v29, 5
    %v194 = vsel %vm90, %v193, %v192
    %v195 = vrot.slane %v30, 4
    %v196 = vsel %vm93, %v195, %v194
    %v197 = vrot.slane %v31, 3
    %v198 = vsel %vm96, %v197, %v196
    %v199 = vrot.slane %v32, 2
    %v200 = vsel %vm99, %v199, %v198
    %v201 = vrot.slane %v33, 1
    %v202 = vsel %vm102, %v201, %v200
    %v203 = vsel %vm104, %v202, 0
    %v206 = vsel %vm107, %v49, 0
    %208 = vmatprep.subr.mxu0 0.0
    %209 = vmatpush1.msra.mxu0 %v34
    %210 = vmatprep.subr.mxu0 0.0
    %211 = vmatpush1.msra.mxu0 %v35
    %212 = vmatprep.subr.mxu0 0.0
    %213 = vmatpush1.msra.mxu0 %v36
    %214 = vmatprep.subr.mxu0 0.0
    %215 = vmatpush1.msra.mxu0 %v37
    %216 = vmatprep.subr.mxu0 0.0
    %217 = vmatpush1.msra.mxu0 %v38
    %218 = vmatprep.subr.mxu0 0.0
    %219 = vmatpush1.msra.mxu0 %v39
    %220 = vmatprep.subr.mxu0 0.0
    %221 = vmatpush1.msra.mxu0 %v40
    %222 = vmatprep.subr.mxu0 0.0
    %223 = vmatpush1.msra.mxu0 %v41
    %224 = vmatprep.subr.mxu0 0.0
    %225 = vmatpush1.msra.mxu0 %v42
    %226 = vmatprep.subr.mxu0 0.0
    %227 = vmatpush1.msra.mxu0 %v43
    %228 = vmatprep.subr.mxu0 0.0
    %229 = vmatpush1.msra.mxu0 %v44
    %230 = vmatprep.subr.mxu0 0.0
    %231 = vmatpush1.msra.mxu0 %v45
    %232 = vmatprep.subr.mxu0 0.0
    %233 = vmatpush1.msra.mxu0 %v46
    %234 = vmatprep.subr.mxu0 0.0
    %235 = vmatpush1.msra.mxu0 %v47
    %236 = vmatprep.subr.mxu0 0.0
    %237 = vmatpush1.msra.mxu0 %v48
    %238 = vmatprep.subr.mxu0 0.0
    %239 = vmatpush1.msra.mxu0 %v206
    %240 = vmatprep.subr.mxu0 0.0
    %241 = vmatpush1.msra.mxu0 0.0
    %242 = vmatprep.subr.mxu0 0.0
    %243 = vmatpush1.msra.mxu0 0.0
    %244 = vmatprep.subr.mxu0 0.0
    %245 = vmatpush1.msra.mxu0 0.0
    %246 = vmatprep.subr.mxu0 0.0
    %247 = vmatpush1.msra.mxu0 0.0
    %248 = vmatprep.subr.mxu0 0.0
    %249 = vmatpush1.msra.mxu0 0.0
    %250 = vmatprep.subr.mxu0 0.0
    %251 = vmatpush1.msra.mxu0 0.0
    %252 = vmatprep.subr.mxu0 0.0
    %253 = vmatpush1.msra.mxu0 0.0
    %254 = vmatprep.subr.mxu0 0.0
    %255 = vmatpush1.msra.mxu0 0.0
    %256 = vmatprep.subr.mxu0 0.0
    %257 = vmatpush1.msra.mxu0 0.0
    %258 = vmatprep.subr.mxu0 0.0
    %259 = vmatpush1.msra.mxu0 0.0
    %260 = vmatprep.subr.mxu0 0.0
    %261 = vmatpush1.msra.mxu0 0.0
    %262 = vmatprep.subr.mxu0 0.0
    %263 = vmatpush1.msra.mxu0 0.0
    %264 = vmatprep.subr.mxu0 0.0
    %265 = vmatpush1.msra.mxu0 0.0
    %266 = vmatprep.subr.mxu0 0.0
    %267 = vmatpush1.msra.mxu0 0.0
    %268 = vmatprep.subr.mxu0 0.0
    %269 = vmatpush1.msra.mxu0 0.0
    %270 = vmatprep.subr.mxu0 0.0
    %271 = vmatpush1.msra.mxu0 0.0
    %272 = vmatprep.mubr.f32.mxu0 0.0
    %273 = vmatmul.mubr.f32.gmra.mrb[0].mxu0 %v203
    %v274 = vpop.f32.mrb[0].mxu0
    %v275 = vadd.f32 %v178, %v274
    %v276 = vpop.f32.mrb[0].mxu0
    %277 = vdwg.mxu0
    %v278 = vld [vmem:[%s0 + $0x2] sm:$0x1]
    %v279 = vld [vmem:[%s0 + $0x1a] sm:$0x1]
    %v280 = vld [vmem:[%s0 + $0x32] sm:$0x1]
    %v281 = vld [vmem:[%s0 + $0x4a] sm:$0x1]
    %v282 = vld [vmem:[%s0 + $0x62] sm:$0x1]
    %v283 = vld [vmem:[%s0 + $0x7a] sm:$0x1]
    %v284 = vld [vmem:[%s0 + $0x92] sm:$0x1]
    %v285 = vld [vmem:[%s0 + $0xaa] sm:$0x1]
    %s286 = scalar_lea.vmem %s1, 256
    %v287 = vld [vmem:[%s286] sm:$0xff]
    %v288 = vld [vmem:[%s286 + $0x8] sm:$0xff]
    %v289 = vld [vmem:[%s286 + $0x10] sm:$0xff]
    %v290 = vld [vmem:[%s286 + $0x18] sm:$0xff]
    %v291 = vld [vmem:[%s286 + $0x20] sm:$0xff]
    %v292 = vld [vmem:[%s286 + $0x28] sm:$0xff]
    %v293 = vld [vmem:[%s286 + $0x30] sm:$0xff]
    %v294 = vld [vmem:[%s286 + $0x38] sm:$0xff]
    %v295 = vld [vmem:[%s286 + $0x40] sm:$0xff]
    %v296 = vld [vmem:[%s286 + $0x48] sm:$0xff]
    %v297 = vld [vmem:[%s286 + $0x50] sm:$0xff]
    %v298 = vld [vmem:[%s286 + $0x58] sm:$0xff]
    %v299 = vld [vmem:[%s286 + $0x60] sm:$0xff]
    %v300 = vld [vmem:[%s286 + $0x68] sm:$0xff]
    %v301 = vld [vmem:[%s286 + $0x70] sm:$0xff]
    %v302 = vld [vmem:[%s286 + $0x78] sm:$0xf]
    %v311 = vrot.slane %v279, 7
    %v312 = vsel %vm84, %v311, %v278
    %v313 = vrot.slane %v280, 6
    %v314 = vsel %vm87, %v313, %v312
    %v315 = vrot.slane %v281, 5
    %v316 = vsel %vm90, %v315, %v314
    %v317 = vrot.slane %v282, 4
    %v318 = vsel %vm93, %v317, %v316
    %v319 = vrot.slane %v283, 3
    %v320 = vsel %vm96, %v319, %v318
    %v321 = vrot.slane %v284, 2
    %v322 = vsel %vm99, %v321, %v320
    %v323 = vrot.slane %v285, 1
    %v324 = vsel %vm102, %v323, %v322
    %v325 = vsel %vm104, %v324, 0
    %v328 = vsel %vm107, %v302, 0
    %330 = vmatprep.subr.mxu0 0.0
    %331 = vmatpush1.msra.mxu0 %v287
    %332 = vmatprep.subr.mxu0 0.0
    %333 = vmatpush1.msra.mxu0 %v288
    %334 = vmatprep.subr.mxu0 0.0
    %335 = vmatpush1.msra.mxu0 %v289
    %336 = vmatprep.subr.mxu0 0.0
    %337 = vmatpush1.msra.mxu0 %v290
    %338 = vmatprep.subr.mxu0 0.0
    %339 = vmatpush1.msra.mxu0 %v291
    %340 = vmatprep.subr.mxu0 0.0
    %341 = vmatpush1.msra.mxu0 %v292
    %342 = vmatprep.subr.mxu0 0.0
    %343 = vmatpush1.msra.mxu0 %v293
    %344 = vmatprep.subr.mxu0 0.0
    %345 = vmatpush1.msra.mxu0 %v294
    %346 = vmatprep.subr.mxu0 0.0
    %347 = vmatpush1.msra.mxu0 %v295
    %348 = vmatprep.subr.mxu0 0.0
    %349 = vmatpush1.msra.mxu0 %v296
    %350 = vmatprep.subr.mxu0 0.0
    %351 = vmatpush1.msra.mxu0 %v297
    %352 = vmatprep.subr.mxu0 0.0
    %353 = vmatpush1.msra.mxu0 %v298
    %354 = vmatprep.subr.mxu0 0.0
    %355 = vmatpush1.msra.mxu0 %v299
    %356 = vmatprep.subr.mxu0 0.0
    %357 = vmatpush1.msra.mxu0 %v300
    %358 = vmatprep.subr.mxu0 0.0
    %359 = vmatpush1.msra.mxu0 %v301
    %360 = vmatprep.subr.mxu0 0.0
    %361 = vmatpush1.msra.mxu0 %v328
    %362 = vmatprep.subr.mxu0 0.0
    %363 = vmatpush1.msra.mxu0 0.0
    %364 = vmatprep.subr.mxu0 0.0
    %365 = vmatpush1.msra.mxu0 0.0
    %366 = vmatprep.subr.mxu0 0.0
    %367 = vmatpush1.msra.mxu0 0.0
    %368 = vmatprep.subr.mxu0 0.0
    %369 = vmatpush1.msra.mxu0 0.0
    %370 = vmatprep.subr.mxu0 0.0
    %371 = vmatpush1.msra.mxu0 0.0
    %372 = vmatprep.subr.mxu0 0.0
    %373 = vmatpush1.msra.mxu0 0.0
    %374 = vmatprep.subr.mxu0 0.0
    %375 = vmatpush1.msra.mxu0 0.0
    %376 = vmatprep.subr.mxu0 0.0
    %377 = vmatpush1.msra.mxu0 0.0
    %378 = vmatprep.subr.mxu0 0.0
    %379 = vmatpush1.msra.mxu0 0.0
    %380 = vmatprep.subr.mxu0 0.0
    %381 = vmatpush1.msra.mxu0 0.0
    %382 = vmatprep.subr.mxu0 0.0
    %383 = vmatpush1.msra.mxu0 0.0
    %384 = vmatprep.subr.mxu0 0.0
    %385 = vmatpush1.msra.mxu0 0.0
    %386 = vmatprep.subr.mxu0 0.0
    %387 = vmatpush1.msra.mxu0 0.0
    %388 = vmatprep.subr.mxu0 0.0
    %389 = vmatpush1.msra.mxu0 0.0
    %390 = vmatprep.subr.mxu0 0.0
    %391 = vmatpush1.msra.mxu0 0.0
    %392 = vmatprep.subr.mxu0 0.0
    %393 = vmatpush1.msra.mxu0 0.0
    %394 = vmatprep.mubr.f32.mxu0 0.0
    %395 = vmatmul.mubr.f32.gmra.mrb[0].mxu0 %v325
    %v396 = vpop.f32.mrb[0].mxu0
    %v397 = vadd.f32 0.0, %v396
    %v398 = vpop.f32.mrb[0].mxu0
    %399 = vdwg.mxu0
    %v400 = vadd.f32 %v275, %v397
    %v401 = vld [vmem:[%s0 + $0x3] sm:$0x1]
    %v402 = vld [vmem:[%s0 + $0x1b] sm:$0x1]
    %v403 = vld [vmem:[%s0 + $0x33] sm:$0x1]
    %v404 = vld [vmem:[%s0 + $0x4b] sm:$0x1]
    %v405 = vld [vmem:[%s0 + $0x63] sm:$0x1]
    %v406 = vld [vmem:[%s0 + $0x7b] sm:$0x1]
    %v407 = vld [vmem:[%s0 + $0x93] sm:$0x1]
    %v408 = vld [vmem:[%s0 + $0xab] sm:$0x1]
    %s409 = scalar_lea.vmem %s1, 384
    %v410 = vld [vmem:[%s409] sm:$0xff]
    %v411 = vld [vmem:[%s409 + $0x8] sm:$0xff]
    %v412 = vld [vmem:[%s409 + $0x10] sm:$0xff]
    %v413 = vld [vmem:[%s409 + $0x18] sm:$0xff]
    %v414 = vld [vmem:[%s409 + $0x20] sm:$0xff]
    %v415 = vld [vmem:[%s409 + $0x28] sm:$0xff]
    %v416 = vld [vmem:[%s409 + $0x30] sm:$0xff]
    %v417 = vld [vmem:[%s409 + $0x38] sm:$0xff]
    %v418 = vld [vmem:[%s409 + $0x40] sm:$0xff]
    %v419 = vld [vmem:[%s409 + $0x48] sm:$0xff]
    %v420 = vld [vmem:[%s409 + $0x50] sm:$0xff]
    %v421 = vld [vmem:[%s409 + $0x58] sm:$0xff]
    %v422 = vld [vmem:[%s409 + $0x60] sm:$0xff]
    %v423 = vld [vmem:[%s409 + $0x68] sm:$0xff]
    %v424 = vld [vmem:[%s409 + $0x70] sm:$0xff]
    %v425 = vld [vmem:[%s409 + $0x78] sm:$0xf]
    %v434 = vrot.slane %v402, 7
    %v435 = vsel %vm84, %v434, %v401
    %v436 = vrot.slane %v403, 6
    %v437 = vsel %vm87, %v436, %v435
    %v438 = vrot.slane %v404, 5
    %v439 = vsel %vm90, %v438, %v437
    %v440 = vrot.slane %v405, 4
    %v441 = vsel %vm93, %v440, %v439
    %v442 = vrot.slane %v406, 3
    %v443 = vsel %vm96, %v442, %v441
    %v444 = vrot.slane %v407, 2
    %v445 = vsel %vm99, %v444, %v443
    %v446 = vrot.slane %v408, 1
    %v447 = vsel %vm102, %v446, %v445
    %v448 = vsel %vm104, %v447, 0
    %v451 = vsel %vm107, %v425, 0
    %453 = vmatprep.subr.mxu0 0.0
    %454 = vmatpush1.msra.mxu0 %v410
    %455 = vmatprep.subr.mxu0 0.0
    %456 = vmatpush1.msra.mxu0 %v411
    %457 = vmatprep.subr.mxu0 0.0
    %458 = vmatpush1.msra.mxu0 %v412
    %459 = vmatprep.subr.mxu0 0.0
    %460 = vmatpush1.msra.mxu0 %v413
    %461 = vmatprep.subr.mxu0 0.0
    %462 = vmatpush1.msra.mxu0 %v414
    %463 = vmatprep.subr.mxu0 0.0
    %464 = vmatpush1.msra.mxu0 %v415
    %465 = vmatprep.subr.mxu0 0.0
    %466 = vmatpush1.msra.mxu0 %v416
    %467 = vmatprep.subr.mxu0 0.0
    %468 = vmatpush1.msra.mxu0 %v417
    %469 = vmatprep.subr.mxu0 0.0
    %470 = vmatpush1.msra.mxu0 %v418
    %471 = vmatprep.subr.mxu0 0.0
    %472 = vmatpush1.msra.mxu0 %v419
    %473 = vmatprep.subr.mxu0 0.0
    %474 = vmatpush1.msra.mxu0 %v420
    %475 = vmatprep.subr.mxu0 0.0
    %476 = vmatpush1.msra.mxu0 %v421
    %477 = vmatprep.subr.mxu0 0.0
    %478 = vmatpush1.msra.mxu0 %v422
    %479 = vmatprep.subr.mxu0 0.0
    %480 = vmatpush1.msra.mxu0 %v423
    %481 = vmatprep.subr.mxu0 0.0
    %482 = vmatpush1.msra.mxu0 %v424
    %483 = vmatprep.subr.mxu0 0.0
    %484 = vmatpush1.msra.mxu0 %v451
    %485 = vmatprep.subr.mxu0 0.0
    %486 = vmatpush1.msra.mxu0 0.0
    %487 = vmatprep.subr.mxu0 0.0
    %488 = vmatpush1.msra.mxu0 0.0
    %489 = vmatprep.subr.mxu0 0.0
    %490 = vmatpush1.msra.mxu0 0.0
    %491 = vmatprep.subr.mxu0 0.0
    %492 = vmatpush1.msra.mxu0 0.0
    %493 = vmatprep.subr.mxu0 0.0
    %494 = vmatpush1.msra.mxu0 0.0
    %495 = vmatprep.subr.mxu0 0.0
    %496 = vmatpush1.msra.mxu0 0.0
    %497 = vmatprep.subr.mxu0 0.0
    %498 = vmatpush1.msra.mxu0 0.0
    %499 = vmatprep.subr.mxu0 0.0
    %500 = vmatpush1.msra.mxu0 0.0
    %501 = vmatprep.subr.mxu0 0.0
    %502 = vmatpush1.msra.mxu0 0.0
    %503 = vmatprep.subr.mxu0 0.0
    %504 = vmatpush1.msra.mxu0 0.0
    %505 = vmatprep.subr.mxu0 0.0
    %506 = vmatpush1.msra.mxu0 0.0
    %507 = vmatprep.subr.mxu0 0.0
    %508 = vmatpush1.msra.mxu0 0.0
    %509 = vmatprep.subr.mxu0 0.0
    %510 = vmatpush1.msra.mxu0 0.0
    %511 = vmatprep.subr.mxu0 0.0
    %512 = vmatpush1.msra.mxu0 0.0
    %513 = vmatprep.subr.mxu0 0.0
    %514 = vmatpush1.msra.mxu0 0.0
    %515 = vmatprep.subr.mxu0 0.0
    %516 = vmatpush1.msra.mxu0 0.0
    %517 = vmatprep.mubr.f32.mxu0 0.0
    %518 = vmatmul.mubr.f32.gmra.mrb[0].mxu0 %v448
    %v519 = vpop.f32.mrb[0].mxu0
    %v520 = vadd.f32 0.0, %v519
    %v521 = vpop.f32.mrb[0].mxu0
    %522 = vdwg.mxu0
    %v523 = vadd.f32 %v400, %v520
    %v524 = vld [vmem:[%s0 + $0x4] sm:$0x1]
    %v525 = vld [vmem:[%s0 + $0x1c] sm:$0x1]
    %v526 = vld [vmem:[%s0 + $0x34] sm:$0x1]
    %v527 = vld [vmem:[%s0 + $0x4c] sm:$0x1]
    %v528 = vld [vmem:[%s0 + $0x64] sm:$0x1]
    %v529 = vld [vmem:[%s0 + $0x7c] sm:$0x1]
    %v530 = vld [vmem:[%s0 + $0x94] sm:$0x1]
    %v531 = vld [vmem:[%s0 + $0xac] sm:$0x1]
    %s532 = scalar_lea.vmem %s1, 512
    %v533 = vld [vmem:[%s532] sm:$0xff]
    %v534 = vld [vmem:[%s532 + $0x8] sm:$0xff]
    %v535 = vld [vmem:[%s532 + $0x10] sm:$0xff]
    %v536 = vld [vmem:[%s532 + $0x18] sm:$0xff]
    %v537 = vld [vmem:[%s532 + $0x20] sm:$0xff]
    %v538 = vld [vmem:[%s532 + $0x28] sm:$0xff]
    %v539 = vld [vmem:[%s532 + $0x30] sm:$0xff]
    %v540 = vld [vmem:[%s532 + $0x38] sm:$0xff]
    %v541 = vld [vmem:[%s532 + $0x40] sm:$0xff]
    %v542 = vld [vmem:[%s532 + $0x48] sm:$0xff]
    %v543 = vld [vmem:[%s532 + $0x50] sm:$0xff]
    %v544 = vld [vmem:[%s532 + $0x58] sm:$0xff]
    %v545 = vld [vmem:[%s532 + $0x60] sm:$0xff]
    %v546 = vld [vmem:[%s532 + $0x68] sm:$0xff]
    %v547 = vld [vmem:[%s532 + $0x70] sm:$0xff]
    %v548 = vld [vmem:[%s532 + $0x78] sm:$0xf]
    %v557 = vrot.slane %v525, 7
    %v558 = vsel %vm84, %v557, %v524
    %v559 = vrot.slane %v526, 6
    %v560 = vsel %vm87, %v559, %v558
    %v561 = vrot.slane %v527, 5
    %v562 = vsel %vm90, %v561, %v560
    %v563 = vrot.slane %v528, 4
    %v564 = vsel %vm93, %v563, %v562
    %v565 = vrot.slane %v529, 3
    %v566 = vsel %vm96, %v565, %v564
    %v567 = vrot.slane %v530, 2
    %v568 = vsel %vm99, %v567, %v566
    %v569 = vrot.slane %v531, 1
    %v570 = vsel %vm102, %v569, %v568
    %v571 = vsel %vm104, %v570, 0
    %v574 = vsel %vm107, %v548, 0
    %576 = vmatprep.subr.mxu0 0.0
    %577 = vmatpush1.msra.mxu0 %v533
    %578 = vmatprep.subr.mxu0 0.0
    %579 = vmatpush1.msra.mxu0 %v534
    %580 = vmatprep.subr.mxu0 0.0
    %581 = vmatpush1.msra.mxu0 %v535
    %582 = vmatprep.subr.mxu0 0.0
    %583 = vmatpush1.msra.mxu0 %v536
    %584 = vmatprep.subr.mxu0 0.0
    %585 = vmatpush1.msra.mxu0 %v537
    %586 = vmatprep.subr.mxu0 0.0
    %587 = vmatpush1.msra.mxu0 %v538
    %588 = vmatprep.subr.mxu0 0.0
    %589 = vmatpush1.msra.mxu0 %v539
    %590 = vmatprep.subr.mxu0 0.0
    %591 = vmatpush1.msra.mxu0 %v540
    %592 = vmatprep.subr.mxu0 0.0
    %593 = vmatpush1.msra.mxu0 %v541
    %594 = vmatprep.subr.mxu0 0.0
    %595 = vmatpush1.msra.mxu0 %v542
    %596 = vmatprep.subr.mxu0 0.0
    %597 = vmatpush1.msra.mxu0 %v543
    %598 = vmatprep.subr.mxu0 0.0
    %599 = vmatpush1.msra.mxu0 %v544
    %600 = vmatprep.subr.mxu0 0.0
    %601 = vmatpush1.msra.mxu0 %v545
    %602 = vmatprep.subr.mxu0 0.0
    %603 = vmatpush1.msra.mxu0 %v546
    %604 = vmatprep.subr.mxu0 0.0
    %605 = vmatpush1.msra.mxu0 %v547
    %606 = vmatprep.subr.mxu0 0.0
    %607 = vmatpush1.msra.mxu0 %v574
    %608 = vmatprep.subr.mxu0 0.0
    %609 = vmatpush1.msra.mxu0 0.0
    %610 = vmatprep.subr.mxu0 0.0
    %611 = vmatpush1.msra.mxu0 0.0
    %612 = vmatprep.subr.mxu0 0.0
    %613 = vmatpush1.msra.mxu0 0.0
    %614 = vmatprep.subr.mxu0 0.0
    %615 = vmatpush1.msra.mxu0 0.0
    %616 = vmatprep.subr.mxu0 0.0
    %617 = vmatpush1.msra.mxu0 0.0
    %618 = vmatprep.subr.mxu0 0.0
    %619 = vmatpush1.msra.mxu0 0.0
    %620 = vmatprep.subr.mxu0 0.0
    %621 = vmatpush1.msra.mxu0 0.0
    %622 = vmatprep.subr.mxu0 0.0
    %623 = vmatpush1.msra.mxu0 0.0
    %624 = vmatprep.subr.mxu0 0.0
    %625 = vmatpush1.msra.mxu0 0.0
    %626 = vmatprep.subr.mxu0 0.0
    %627 = vmatpush1.msra.mxu0 0.0
    %628 = vmatprep.subr.mxu0 0.0
    %629 = vmatpush1.msra.mxu0 0.0
    %630 = vmatprep.subr.mxu0 0.0
    %631 = vmatpush1.msra.mxu0 0.0
    %632 = vmatprep.subr.mxu0 0.0
    %633 = vmatpush1.msra.mxu0 0.0
    %634 = vmatprep.subr.mxu0 0.0
    %635 = vmatpush1.msra.mxu0 0.0
    %636 = vmatprep.subr.mxu0 0.0
    %637 = vmatpush1.msra.mxu0 0.0
    %638 = vmatprep.subr.mxu0 0.0
    %639 = vmatpush1.msra.mxu0 0.0
    %640 = vmatprep.mubr.f32.mxu0 0.0
    %641 = vmatmul.mubr.f32.gmra.mrb[0].mxu0 %v571
    %v642 = vpop.f32.mrb[0].mxu0
    %v643 = vadd.f32 0.0, %v642
    %v644 = vpop.f32.mrb[0].mxu0
    %645 = vdwg.mxu0
    %v646 = vadd.f32 %v523, %v643
    %v647 = vld [vmem:[%s0 + $0x5] sm:$0x1]
    %v648 = vld [vmem:[%s0 + $0x1d] sm:$0x1]
    %v649 = vld [vmem:[%s0 + $0x35] sm:$0x1]
    %v650 = vld [vmem:[%s0 + $0x4d] sm:$0x1]
    %v651 = vld [vmem:[%s0 + $0x65] sm:$0x1]
    %v652 = vld [vmem:[%s0 + $0x7d] sm:$0x1]
    %v653 = vld [vmem:[%s0 + $0x95] sm:$0x1]
    %v654 = vld [vmem:[%s0 + $0xad] sm:$0x1]
    %s655 = scalar_lea.vmem %s1, 640
    %v656 = vld [vmem:[%s655] sm:$0xff]
    %v657 = vld [vmem:[%s655 + $0x8] sm:$0xff]
    %v658 = vld [vmem:[%s655 + $0x10] sm:$0xff]
    %v659 = vld [vmem:[%s655 + $0x18] sm:$0xff]
    %v660 = vld [vmem:[%s655 + $0x20] sm:$0xff]
    %v661 = vld [vmem:[%s655 + $0x28] sm:$0xff]
    %v662 = vld [vmem:[%s655 + $0x30] sm:$0xff]
    %v663 = vld [vmem:[%s655 + $0x38] sm:$0xff]
    %v664 = vld [vmem:[%s655 + $0x40] sm:$0xff]
    %v665 = vld [vmem:[%s655 + $0x48] sm:$0xff]
    %v666 = vld [vmem:[%s655 + $0x50] sm:$0xff]
    %v667 = vld [vmem:[%s655 + $0x58] sm:$0xff]
    %v668 = vld [vmem:[%s655 + $0x60] sm:$0xff]
    %v669 = vld [vmem:[%s655 + $0x68] sm:$0xff]
    %v670 = vld [vmem:[%s655 + $0x70] sm:$0xff]
    %v671 = vld [vmem:[%s655 + $0x78] sm:$0xf]
    %v680 = vrot.slane %v648, 7
    %v681 = vsel %vm84, %v680, %v647
    %v682 = vrot.slane %v649, 6
    %v683 = vsel %vm87, %v682, %v681
    %v684 = vrot.slane %v650, 5
    %v685 = vsel %vm90, %v684, %v683
    %v686 = vrot.slane %v651, 4
    %v687 = vsel %vm93, %v686, %v685
    %v688 = vrot.slane %v652, 3
    %v689 = vsel %vm96, %v688, %v687
    %v690 = vrot.slane %v653, 2
    %v691 = vsel %vm99, %v690, %v689
    %v692 = vrot.slane %v654, 1
    %v693 = vsel %vm102, %v692, %v691
    %v694 = vsel %vm104, %v693, 0
    %v697 = vsel %vm107, %v671, 0
    %699 = vmatprep.subr.mxu0 0.0
    %700 = vmatpush1.msra.mxu0 %v656
    %701 = vmatprep.subr.mxu0 0.0
    %702 = vmatpush1.msra.mxu0 %v657
    %703 = vmatprep.subr.mxu0 0.0
    %704 = vmatpush1.msra.mxu0 %v658
    %705 = vmatprep.subr.mxu0 0.0
    %706 = vmatpush1.msra.mxu0 %v659
    %707 = vmatprep.subr.mxu0 0.0
    %708 = vmatpush1.msra.mxu0 %v660
    %709 = vmatprep.subr.mxu0 0.0
    %710 = vmatpush1.msra.mxu0 %v661
    %711 = vmatprep.subr.mxu0 0.0
    %712 = vmatpush1.msra.mxu0 %v662
    %713 = vmatprep.subr.mxu0 0.0
    %714 = vmatpush1.msra.mxu0 %v663
    %715 = vmatprep.subr.mxu0 0.0
    %716 = vmatpush1.msra.mxu0 %v664
    %717 = vmatprep.subr.mxu0 0.0
    %718 = vmatpush1.msra.mxu0 %v665
    %719 = vmatprep.subr.mxu0 0.0
    %720 = vmatpush1.msra.mxu0 %v666
    %721 = vmatprep.subr.mxu0 0.0
    %722 = vmatpush1.msra.mxu0 %v667
    %723 = vmatprep.subr.mxu0 0.0
    %724 = vmatpush1.msra.mxu0 %v668
    %725 = vmatprep.subr.mxu0 0.0
    %726 = vmatpush1.msra.mxu0 %v669
    %727 = vmatprep.subr.mxu0 0.0
    %728 = vmatpush1.msra.mxu0 %v670
    %729 = vmatprep.subr.mxu0 0.0
    %730 = vmatpush1.msra.mxu0 %v697
    %731 = vmatprep.subr.mxu0 0.0
    %732 = vmatpush1.msra.mxu0 0.0
    %733 = vmatprep.subr.mxu0 0.0
    %734 = vmatpush1.msra.mxu0 0.0
    %735 = vmatprep.subr.mxu0 0.0
    %736 = vmatpush1.msra.mxu0 0.0
    %737 = vmatprep.subr.mxu0 0.0
    %738 = vmatpush1.msra.mxu0 0.0
    %739 = vmatprep.subr.mxu0 0.0
    %740 = vmatpush1.msra.mxu0 0.0
    %741 = vmatprep.subr.mxu0 0.0
    %742 = vmatpush1.msra.mxu0 0.0
    %743 = vmatprep.subr.mxu0 0.0
    %744 = vmatpush1.msra.mxu0 0.0
    %745 = vmatprep.subr.mxu0 0.0
    %746 = vmatpush1.msra.mxu0 0.0
    %747 = vmatprep.subr.mxu0 0.0
    %748 = vmatpush1.msra.mxu0 0.0
    %749 = vmatprep.subr.mxu0 0.0
    %750 = vmatpush1.msra.mxu0 0.0
    %751 = vmatprep.subr.mxu0 0.0
    %752 = vmatpush1.msra.mxu0 0.0
    %753 = vmatprep.subr.mxu0 0.0
    %754 = vmatpush1.msra.mxu0 0.0
    %755 = vmatprep.subr.mxu0 0.0
    %756 = vmatpush1.msra.mxu0 0.0
    %757 = vmatprep.subr.mxu0 0.0
    %758 = vmatpush1.msra.mxu0 0.0
    %759 = vmatprep.subr.mxu0 0.0
    %760 = vmatpush1.msra.mxu0 0.0
    %761 = vmatprep.subr.mxu0 0.0
    %762 = vmatpush1.msra.mxu0 0.0
    %763 = vmatprep.mubr.f32.mxu0 0.0
    %764 = vmatmul.mubr.f32.gmra.mrb[0].mxu0 %v694
    %v765 = vpop.f32.mrb[0].mxu0
    %v766 = vadd.f32 0.0, %v765
    %v767 = vpop.f32.mrb[0].mxu0
    %768 = vdwg.mxu0
    %v769 = vadd.f32 %v646, %v766
    %v770 = vld [vmem:[%s0 + $0x6] sm:$0x1]
    %v771 = vld [vmem:[%s0 + $0x1e] sm:$0x1]
    %v772 = vld [vmem:[%s0 + $0x36] sm:$0x1]
    %v773 = vld [vmem:[%s0 + $0x4e] sm:$0x1]
    %v774 = vld [vmem:[%s0 + $0x66] sm:$0x1]
    %v775 = vld [vmem:[%s0 + $0x7e] sm:$0x1]
    %v776 = vld [vmem:[%s0 + $0x96] sm:$0x1]
    %v777 = vld [vmem:[%s0 + $0xae] sm:$0x1]
    %s778 = scalar_lea.vmem %s1, 768
    %v779 = vld [vmem:[%s778] sm:$0xff]
    %v780 = vld [vmem:[%s778 + $0x8] sm:$0xff]
    %v781 = vld [vmem:[%s778 + $0x10] sm:$0xff]
    %v782 = vld [vmem:[%s778 + $0x18] sm:$0xff]
    %v783 = vld [vmem:[%s778 + $0x20] sm:$0xff]
    %v784 = vld [vmem:[%s778 + $0x28] sm:$0xff]
    %v785 = vld [vmem:[%s778 + $0x30] sm:$0xff]
    %v786 = vld [vmem:[%s778 + $0x38] sm:$0xff]
    %v787 = vld [vmem:[%s778 + $0x40] sm:$0xff]
    %v788 = vld [vmem:[%s778 + $0x48] sm:$0xff]
    %v789 = vld [vmem:[%s778 + $0x50] sm:$0xff]
    %v790 = vld [vmem:[%s778 + $0x58] sm:$0xff]
    %v791 = vld [vmem:[%s778 + $0x60] sm:$0xff]
    %v792 = vld [vmem:[%s778 + $0x68] sm:$0xff]
    %v793 = vld [vmem:[%s778 + $0x70] sm:$0xff]
    %v794 = vld [vmem:[%s778 + $0x78] sm:$0xf]
    %v803 = vrot.slane %v771, 7
    %v804 = vsel %vm84, %v803, %v770
    %v805 = vrot.slane %v772, 6
    %v806 = vsel %vm87, %v805, %v804
    %v807 = vrot.slane %v773, 5
    %v808 = vsel %vm90, %v807, %v806
    %v809 = vrot.slane %v774, 4
    %v810 = vsel %vm93, %v809, %v808
    %v811 = vrot.slane %v775, 3
    %v812 = vsel %vm96, %v811, %v810
    %v813 = vrot.slane %v776, 2
    %v814 = vsel %vm99, %v813, %v812
    %v815 = vrot.slane %v777, 1
    %v816 = vsel %vm102, %v815, %v814
    %v817 = vsel %vm104, %v816, 0
    %v820 = vsel %vm107, %v794, 0
    %822 = vmatprep.subr.mxu0 0.0
    %823 = vmatpush1.msra.mxu0 %v779
    %824 = vmatprep.subr.mxu0 0.0
    %825 = vmatpush1.msra.mxu0 %v780
    %826 = vmatprep.subr.mxu0 0.0
    %827 = vmatpush1.msra.mxu0 %v781
    %828 = vmatprep.subr.mxu0 0.0
    %829 = vmatpush1.msra.mxu0 %v782
    %830 = vmatprep.subr.mxu0 0.0
    %831 = vmatpush1.msra.mxu0 %v783
    %832 = vmatprep.subr.mxu0 0.0
    %833 = vmatpush1.msra.mxu0 %v784
    %834 = vmatprep.subr.mxu0 0.0
    %835 = vmatpush1.msra.mxu0 %v785
    %836 = vmatprep.subr.mxu0 0.0
    %837 = vmatpush1.msra.mxu0 %v786
    %838 = vmatprep.subr.mxu0 0.0
    %839 = vmatpush1.msra.mxu0 %v787
    %840 = vmatprep.subr.mxu0 0.0
    %841 = vmatpush1.msra.mxu0 %v788
    %842 = vmatprep.subr.mxu0 0.0
    %843 = vmatpush1.msra.mxu0 %v789
    %844 = vmatprep.subr.mxu0 0.0
    %845 = vmatpush1.msra.mxu0 %v790
    %846 = vmatprep.subr.mxu0 0.0
    %847 = vmatpush1.msra.mxu0 %v791
    %848 = vmatprep.subr.mxu0 0.0
    %849 = vmatpush1.msra.mxu0 %v792
    %850 = vmatprep.subr.mxu0 0.0
    %851 = vmatpush1.msra.mxu0 %v793
    %852 = vmatprep.subr.mxu0 0.0
    %853 = vmatpush1.msra.mxu0 %v820
    %854 = vmatprep.subr.mxu0 0.0
    %855 = vmatpush1.msra.mxu0 0.0
    %856 = vmatprep.subr.mxu0 0.0
    %857 = vmatpush1.msra.mxu0 0.0
    %858 = vmatprep.subr.mxu0 0.0
    %859 = vmatpush1.msra.mxu0 0.0
    %860 = vmatprep.subr.mxu0 0.0
    %861 = vmatpush1.msra.mxu0 0.0
    %862 = vmatprep.subr.mxu0 0.0
    %863 = vmatpush1.msra.mxu0 0.0
    %864 = vmatprep.subr.mxu0 0.0
    %865 = vmatpush1.msra.mxu0 0.0
    %866 = vmatprep.subr.mxu0 0.0
    %867 = vmatpush1.msra.mxu0 0.0
    %868 = vmatprep.subr.mxu0 0.0
    %869 = vmatpush1.msra.mxu0 0.0
    %870 = vmatprep.subr.mxu0 0.0
    %871 = vmatpush1.msra.mxu0 0.0
    %872 = vmatprep.subr.mxu0 0.0
    %873 = vmatpush1.msra.mxu0 0.0
    %874 = vmatprep.subr.mxu0 0.0
    %875 = vmatpush1.msra.mxu0 0.0
    %876 = vmatprep.subr.mxu0 0.0
    %877 = vmatpush1.msra.mxu0 0.0
    %878 = vmatprep.subr.mxu0 0.0
    %879 = vmatpush1.msra.mxu0 0.0
    %880 = vmatprep.subr.mxu0 0.0
    %881 = vmatpush1.msra.mxu0 0.0
    %882 = vmatprep.subr.mxu0 0.0
    %883 = vmatpush1.msra.mxu0 0.0
    %884 = vmatprep.subr.mxu0 0.0
    %885 = vmatpush1.msra.mxu0 0.0
    %886 = vmatprep.mubr.f32.mxu0 0.0
    %887 = vmatmul.mubr.f32.gmra.mrb[0].mxu0 %v817
    %v888 = vpop.f32.mrb[0].mxu0
    %v889 = vadd.f32 0.0, %v888
    %v890 = vpop.f32.mrb[0].mxu0
    %891 = vdwg.mxu0
    %v892 = vadd.f32 %v769, %v889
    %v893 = vld [vmem:[%s0 + $0x7] sm:$0x1]
    %v894 = vld [vmem:[%s0 + $0x1f] sm:$0x1]
    %v895 = vld [vmem:[%s0 + $0x37] sm:$0x1]
    %v896 = vld [vmem:[%s0 + $0x4f] sm:$0x1]
    %v897 = vld [vmem:[%s0 + $0x67] sm:$0x1]
    %v898 = vld [vmem:[%s0 + $0x7f] sm:$0x1]
    %v899 = vld [vmem:[%s0 + $0x97] sm:$0x1]
    %v900 = vld [vmem:[%s0 + $0xaf] sm:$0x1]
    %s901 = scalar_lea.vmem %s1, 896
    %v902 = vld [vmem:[%s901] sm:$0xff]
    %v903 = vld [vmem:[%s901 + $0x8] sm:$0xff]
    %v904 = vld [vmem:[%s901 + $0x10] sm:$0xff]
    %v905 = vld [vmem:[%s901 + $0x18] sm:$0xff]
    %v906 = vld [vmem:[%s901 + $0x20] sm:$0xff]
    %v907 = vld [vmem:[%s901 + $0x28] sm:$0xff]
    %v908 = vld [vmem:[%s901 + $0x30] sm:$0xff]
    %v909 = vld [vmem:[%s901 + $0x38] sm:$0xff]
    %v910 = vld [vmem:[%s901 + $0x40] sm:$0xff]
    %v911 = vld [vmem:[%s901 + $0x48] sm:$0xff]
    %v912 = vld [vmem:[%s901 + $0x50] sm:$0xff]
    %v913 = vld [vmem:[%s901 + $0x58] sm:$0xff]
    %v914 = vld [vmem:[%s901 + $0x60] sm:$0xff]
    %v915 = vld [vmem:[%s901 + $0x68] sm:$0xff]
    %v916 = vld [vmem:[%s901 + $0x70] sm:$0xff]
    %v917 = vld [vmem:[%s901 + $0x78] sm:$0xf]
    %v926 = vrot.slane %v894, 7
    %v927 = vsel %vm84, %v926, %v893
    %v928 = vrot.slane %v895, 6
    %v929 = vsel %vm87, %v928, %v927
    %v930 = vrot.slane %v896, 5
    %v931 = vsel %vm90, %v930, %v929
    %v932 = vrot.slane %v897, 4
    %v933 = vsel %vm93, %v932, %v931
    %v934 = vrot.slane %v898, 3
    %v935 = vsel %vm96, %v934, %v933
    %v936 = vrot.slane %v899, 2
    %v937 = vsel %vm99, %v936, %v935
    %v938 = vrot.slane %v900, 1
    %v939 = vsel %vm102, %v938, %v937
    %v940 = vsel %vm104, %v939, 0
    %v943 = vsel %vm107, %v917, 0
    %945 = vmatprep.subr.mxu0 0.0
    %946 = vmatpush1.msra.mxu0 %v902
    %947 = vmatprep.subr.mxu0 0.0
    %948 = vmatpush1.msra.mxu0 %v903
    %949 = vmatprep.subr.mxu0 0.0
    %950 = vmatpush1.msra.mxu0 %v904
    %951 = vmatprep.subr.mxu0 0.0
    %952 = vmatpush1.msra.mxu0 %v905
    %953 = vmatprep.subr.mxu0 0.0
    %954 = vmatpush1.msra.mxu0 %v906
    %955 = vmatprep.subr.mxu0 0.0
    %956 = vmatpush1.msra.mxu0 %v907
    %957 = vmatprep.subr.mxu0 0.0
    %958 = vmatpush1.msra.mxu0 %v908
    %959 = vmatprep.subr.mxu0 0.0
    %960 = vmatpush1.msra.mxu0 %v909
    %961 = vmatprep.subr.mxu0 0.0
    %962 = vmatpush1.msra.mxu0 %v910
    %963 = vmatprep.subr.mxu0 0.0
    %964 = vmatpush1.msra.mxu0 %v911
    %965 = vmatprep.subr.mxu0 0.0
    %966 = vmatpush1.msra.mxu0 %v912
    %967 = vmatprep.subr.mxu0 0.0
    %968 = vmatpush1.msra.mxu0 %v913
    %969 = vmatprep.subr.mxu0 0.0
    %970 = vmatpush1.msra.mxu0 %v914
    %971 = vmatprep.subr.mxu0 0.0
    %972 = vmatpush1.msra.mxu0 %v915
    %973 = vmatprep.subr.mxu0 0.0
    %974 = vmatpush1.msra.mxu0 %v916
    %975 = vmatprep.subr.mxu0 0.0
    %976 = vmatpush1.msra.mxu0 %v943
    %977 = vmatprep.subr.mxu0 0.0
    %978 = vmatpush1.msra.mxu0 0.0
    %979 = vmatprep.subr.mxu0 0.0
    %980 = vmatpush1.msra.mxu0 0.0
    %981 = vmatprep.subr.mxu0 0.0
    %982 = vmatpush1.msra.mxu0 0.0
    %983 = vmatprep.subr.mxu0 0.0
    %984 = vmatpush1.msra.mxu0 0.0
    %985 = vmatprep.subr.mxu0 0.0
    %986 = vmatpush1.msra.mxu0 0.0
    %987 = vmatprep.subr.mxu0 0.0
    %988 = vmatpush1.msra.mxu0 0.0
    %989 = vmatprep.subr.mxu0 0.0
    %990 = vmatpush1.msra.mxu0 0.0
    %991 = vmatprep.subr.mxu0 0.0
    %992 = vmatpush1.msra.mxu0 0.0
    %993 = vmatprep.subr.mxu0 0.0
    %994 = vmatpush1.msra.mxu0 0.0
    %995 = vmatprep.subr.mxu0 0.0
    %996 = vmatpush1.msra.mxu0 0.0
    %997 = vmatprep.subr.mxu0 0.0
    %998 = vmatpush1.msra.mxu0 0.0
    %999 = vmatprep.subr.mxu0 0.0
    %1000 = vmatpush1.msra.mxu0 0.0
    %1001 = vmatprep.subr.mxu0 0.0
    %1002 = vmatpush1.msra.mxu0 0.0
    %1003 = vmatprep.subr.mxu0 0.0
    %1004 = vmatpush1.msra.mxu0 0.0
    %1005 = vmatprep.subr.mxu0 0.0
    %1006 = vmatpush1.msra.mxu0 0.0
    %1007 = vmatprep.subr.mxu0 0.0
    %1008 = vmatpush1.msra.mxu0 0.0
    %1009 = vmatprep.mubr.f32.mxu0 0.0
    %1010 = vmatmul.mubr.f32.gmra.mrb[0].mxu0 %v940
    %v1011 = vpop.f32.mrb[0].mxu0
    %v1012 = vadd.f32 0.0, %v1011
    %v1013 = vpop.f32.mrb[0].mxu0
    %1014 = vdwg.mxu0
    %v1015 = vadd.f32 %v892, %v1012
    %v1016 = vld [vmem:[%s0 + $0x8] sm:$0x1]
    %v1017 = vld [vmem:[%s0 + $0x20] sm:$0x1]
    %v1018 = vld [vmem:[%s0 + $0x38] sm:$0x1]
    %v1019 = vld [vmem:[%s0 + $0x50] sm:$0x1]
    %v1020 = vld [vmem:[%s0 + $0x68] sm:$0x1]
    %v1021 = vld [vmem:[%s0 + $0x80] sm:$0x1]
    %v1022 = vld [vmem:[%s0 + $0x98] sm:$0x1]
    %v1023 = vld [vmem:[%s0 + $0xb0] sm:$0x1]
    %s1024 = scalar_lea.vmem %s1, 1024
    %v1025 = vld [vmem:[%s1024] sm:$0xff]
    %v1026 = vld [vmem:[%s1024 + $0x8] sm:$0xff]
    %v1027 = vld [vmem:[%s1024 + $0x10] sm:$0xff]
    %v1028 = vld [vmem:[%s1024 + $0x18] sm:$0xff]
    %v1029 = vld [vmem:[%s1024 + $0x20] sm:$0xff]
    %v1030 = vld [vmem:[%s1024 + $0x28] sm:$0xff]
    %v1031 = vld [vmem:[%s1024 + $0x30] sm:$0xff]
    %v1032 = vld [vmem:[%s1024 + $0x38] sm:$0xff]
    %v1033 = vld [vmem:[%s1024 + $0x40] sm:$0xff]
    %v1034 = vld [vmem:[%s1024 + $0x48] sm:$0xff]
    %v1035 = vld [vmem:[%s1024 + $0x50] sm:$0xff]
    %v1036 = vld [vmem:[%s1024 + $0x58] sm:$0xff]
    %v1037 = vld [vmem:[%s1024 + $0x60] sm:$0xff]
    %v1038 = vld [vmem:[%s1024 + $0x68] sm:$0xff]
    %v1039 = vld [vmem:[%s1024 + $0x70] sm:$0xff]
    %v1040 = vld [vmem:[%s1024 + $0x78] sm:$0xf]
    %v1049 = vrot.slane %v1017, 7
    %v1050 = vsel %vm84, %v1049, %v1016
    %v1051 = vrot.slane %v1018, 6
    %v1052 = vsel %vm87, %v1051, %v1050
    %v1053 = vrot.slane %v1019, 5
    %v1054 = vsel %vm90, %v1053, %v1052
    %v1055 = vrot.slane %v1020, 4
    %v1056 = vsel %vm93, %v1055, %v1054
    %v1057 = vrot.slane %v1021, 3
    %v1058 = vsel %vm96, %v1057, %v1056
    %v1059 = vrot.slane %v1022, 2
    %v1060 = vsel %vm99, %v1059, %v1058
    %v1061 = vrot.slane %v1023, 1
    %v1062 = vsel %vm102, %v1061, %v1060
    %v1063 = vsel %vm104, %v1062, 0
    %v1066 = vsel %vm107, %v1040, 0
    %1068 = vmatprep.subr.mxu0 0.0
    %1069 = vmatpush1.msra.mxu0 %v1025
    %1070 = vmatprep.subr.mxu0 0.0
    %1071 = vmatpush1.msra.mxu0 %v1026
    %1072 = vmatprep.subr.mxu0 0.0
    %1073 = vmatpush1.msra.mxu0 %v1027
    %1074 = vmatprep.subr.mxu0 0.0
    %1075 = vmatpush1.msra.mxu0 %v1028
    %1076 = vmatprep.subr.mxu0 0.0
    %1077 = vmatpush1.msra.mxu0 %v1029
    %1078 = vmatprep.subr.mxu0 0.0
    %1079 = vmatpush1.msra.mxu0 %v1030
    %1080 = vmatprep.subr.mxu0 0.0
    %1081 = vmatpush1.msra.mxu0 %v1031
    %1082 = vmatprep.subr.mxu0 0.0
    %1083 = vmatpush1.msra.mxu0 %v1032
    %1084 = vmatprep.subr.mxu0 0.0
    %1085 = vmatpush1.msra.mxu0 %v1033
    %1086 = vmatprep.subr.mxu0 0.0
    %1087 = vmatpush1.msra.mxu0 %v1034
    %1088 = vmatprep.subr.mxu0 0.0
    %1089 = vmatpush1.msra.mxu0 %v1035
    %1090 = vmatprep.subr.mxu0 0.0
    %1091 = vmatpush1.msra.mxu0 %v1036
    %1092 = vmatprep.subr.mxu0 0.0
    %1093 = vmatpush1.msra.mxu0 %v1037
    %1094 = vmatprep.subr.mxu0 0.0
    %1095 = vmatpush1.msra.mxu0 %v1038
    %1096 = vmatprep.subr.mxu0 0.0
    %1097 = vmatpush1.msra.mxu0 %v1039
    %1098 = vmatprep.subr.mxu0 0.0
    %1099 = vmatpush1.msra.mxu0 %v1066
    %1100 = vmatprep.subr.mxu0 0.0
    %1101 = vmatpush1.msra.mxu0 0.0
    %1102 = vmatprep.subr.mxu0 0.0
    %1103 = vmatpush1.msra.mxu0 0.0
    %1104 = vmatprep.subr.mxu0 0.0
    %1105 = vmatpush1.msra.mxu0 0.0
    %1106 = vmatprep.subr.mxu0 0.0
    %1107 = vmatpush1.msra.mxu0 0.0
    %1108 = vmatprep.subr.mxu0 0.0
    %1109 = vmatpush1.msra.mxu0 0.0
    %1110 = vmatprep.subr.mxu0 0.0
    %1111 = vmatpush1.msra.mxu0 0.0
    %1112 = vmatprep.subr.mxu0 0.0
    %1113 = vmatpush1.msra.mxu0 0.0
    %1114 = vmatprep.subr.mxu0 0.0
    %1115 = vmatpush1.msra.mxu0 0.0
    %1116 = vmatprep.subr.mxu0 0.0
    %1117 = vmatpush1.msra.mxu0 0.0
    %1118 = vmatprep.subr.mxu0 0.0
    %1119 = vmatpush1.msra.mxu0 0.0
    %1120 = vmatprep.subr.mxu0 0.0
    %1121 = vmatpush1.msra.mxu0 0.0
    %1122 = vmatprep.subr.mxu0 0.0
    %1123 = vmatpush1.msra.mxu0 0.0
    %1124 = vmatprep.subr.mxu0 0.0
    %1125 = vmatpush1.msra.mxu0 0.0
    %1126 = vmatprep.subr.mxu0 0.0
    %1127 = vmatpush1.msra.mxu0 0.0
    %1128 = vmatprep.subr.mxu0 0.0
    %1129 = vmatpush1.msra.mxu0 0.0
    %1130 = vmatprep.subr.mxu0 0.0
    %1131 = vmatpush1.msra.mxu0 0.0
    %1132 = vmatprep.mubr.f32.mxu0 0.0
    %1133 = vmatmul.mubr.f32.gmra.mrb[0].mxu0 %v1063
    %v1134 = vpop.f32.mrb[0].mxu0
    %v1135 = vadd.f32 0.0, %v1134
    %v1136 = vpop.f32.mrb[0].mxu0
    %1137 = vdwg.mxu0
    %v1138 = vadd.f32 %v1015, %v1135
    %v1139 = vld [vmem:[%s0 + $0x9] sm:$0x1]
    %v1140 = vld [vmem:[%s0 + $0x21] sm:$0x1]
    %v1141 = vld [vmem:[%s0 + $0x39] sm:$0x1]
    %v1142 = vld [vmem:[%s0 + $0x51] sm:$0x1]
    %v1143 = vld [vmem:[%s0 + $0x69] sm:$0x1]
    %v1144 = vld [vmem:[%s0 + $0x81] sm:$0x1]
    %v1145 = vld [vmem:[%s0 + $0x99] sm:$0x1]
    %v1146 = vld [vmem:[%s0 + $0xb1] sm:$0x1]
    %s1147 = scalar_lea.vmem %s1, 1152
    %v1148 = vld [vmem:[%s1147] sm:$0xff]
    %v1149 = vld [vmem:[%s1147 + $0x8] sm:$0xff]
    %v1150 = vld [vmem:[%s1147 + $0x10] sm:$0xff]
    %v1151 = vld [vmem:[%s1147 + $0x18] sm:$0xff]
    %v1152 = vld [vmem:[%s1147 + $0x20] sm:$0xff]
    %v1153 = vld [vmem:[%s1147 + $0x28] sm:$0xff]
    %v1154 = vld [vmem:[%s1147 + $0x30] sm:$0xff]
    %v1155 = vld [vmem:[%s1147 + $0x38] sm:$0xff]
    %v1156 = vld [vmem:[%s1147 + $0x40] sm:$0xff]
    %v1157 = vld [vmem:[%s1147 + $0x48] sm:$0xff]
    %v1158 = vld [vmem:[%s1147 + $0x50] sm:$0xff]
    %v1159 = vld [vmem:[%s1147 + $0x58] sm:$0xff]
    %v1160 = vld [vmem:[%s1147 + $0x60] sm:$0xff]
    %v1161 = vld [vmem:[%s1147 + $0x68] sm:$0xff]
    %v1162 = vld [vmem:[%s1147 + $0x70] sm:$0xff]
    %v1163 = vld [vmem:[%s1147 + $0x78] sm:$0xf]
    %v1172 = vrot.slane %v1140, 7
    %v1173 = vsel %vm84, %v1172, %v1139
    %v1174 = vrot.slane %v1141, 6
    %v1175 = vsel %vm87, %v1174, %v1173
    %v1176 = vrot.slane %v1142, 5
    %v1177 = vsel %vm90, %v1176, %v1175
    %v1178 = vrot.slane %v1143, 4
    %v1179 = vsel %vm93, %v1178, %v1177
    %v1180 = vrot.slane %v1144, 3
    %v1181 = vsel %vm96, %v1180, %v1179
    %v1182 = vrot.slane %v1145, 2
    %v1183 = vsel %vm99, %v1182, %v1181
    %v1184 = vrot.slane %v1146, 1
    %v1185 = vsel %vm102, %v1184, %v1183
    %v1186 = vsel %vm104, %v1185, 0
    %v1189 = vsel %vm107, %v1163, 0
    %1191 = vmatprep.subr.mxu0 0.0
    %1192 = vmatpush1.msra.mxu0 %v1148
    %1193 = vmatprep.subr.mxu0 0.0
    %1194 = vmatpush1.msra.mxu0 %v1149
    %1195 = vmatprep.subr.mxu0 0.0
    %1196 = vmatpush1.msra.mxu0 %v1150
    %1197 = vmatprep.subr.mxu0 0.0
    %1198 = vmatpush1.msra.mxu0 %v1151
    %1199 = vmatprep.subr.mxu0 0.0
    %1200 = vmatpush1.msra.mxu0 %v1152
    %1201 = vmatprep.subr.mxu0 0.0
    %1202 = vmatpush1.msra.mxu0 %v1153
    %1203 = vmatprep.subr.mxu0 0.0
    %1204 = vmatpush1.msra.mxu0 %v1154
    %1205 = vmatprep.subr.mxu0 0.0
    %1206 = vmatpush1.msra.mxu0 %v1155
    %1207 = vmatprep.subr.mxu0 0.0
    %1208 = vmatpush1.msra.mxu0 %v1156
    %1209 = vmatprep.subr.mxu0 0.0
    %1210 = vmatpush1.msra.mxu0 %v1157
    %1211 = vmatprep.subr.mxu0 0.0
    %1212 = vmatpush1.msra.mxu0 %v1158
    %1213 = vmatprep.subr.mxu0 0.0
    %1214 = vmatpush1.msra.mxu0 %v1159
    %1215 = vmatprep.subr.mxu0 0.0
    %1216 = vmatpush1.msra.mxu0 %v1160
    %1217 = vmatprep.subr.mxu0 0.0
    %1218 = vmatpush1.msra.mxu0 %v1161
    %1219 = vmatprep.subr.mxu0 0.0
    %1220 = vmatpush1.msra.mxu0 %v1162
    %1221 = vmatprep.subr.mxu0 0.0
    %1222 = vmatpush1.msra.mxu0 %v1189
    %1223 = vmatprep.subr.mxu0 0.0
    %1224 = vmatpush1.msra.mxu0 0.0
    %1225 = vmatprep.subr.mxu0 0.0
    %1226 = vmatpush1.msra.mxu0 0.0
    %1227 = vmatprep.subr.mxu0 0.0
    %1228 = vmatpush1.msra.mxu0 0.0
    %1229 = vmatprep.subr.mxu0 0.0
    %1230 = vmatpush1.msra.mxu0 0.0
    %1231 = vmatprep.subr.mxu0 0.0
    %1232 = vmatpush1.msra.mxu0 0.0
    %1233 = vmatprep.subr.mxu0 0.0
    %1234 = vmatpush1.msra.mxu0 0.0
    %1235 = vmatprep.subr.mxu0 0.0
    %1236 = vmatpush1.msra.mxu0 0.0
    %1237 = vmatprep.subr.mxu0 0.0
    %1238 = vmatpush1.msra.mxu0 0.0
    %1239 = vmatprep.subr.mxu0 0.0
    %1240 = vmatpush1.msra.mxu0 0.0
    %1241 = vmatprep.subr.mxu0 0.0
    %1242 = vmatpush1.msra.mxu0 0.0
    %1243 = vmatprep.subr.mxu0 0.0
    %1244 = vmatpush1.msra.mxu0 0.0
    %1245 = vmatprep.subr.mxu0 0.0
    %1246 = vmatpush1.msra.mxu0 0.0
    %1247 = vmatprep.subr.mxu0 0.0
    %1248 = vmatpush1.msra.mxu0 0.0
    %1249 = vmatprep.subr.mxu0 0.0
    %1250 = vmatpush1.msra.mxu0 0.0
    %1251 = vmatprep.subr.mxu0 0.0
    %1252 = vmatpush1.msra.mxu0 0.0
    %1253 = vmatprep.subr.mxu0 0.0
    %1254 = vmatpush1.msra.mxu0 0.0
    %1255 = vmatprep.mubr.f32.mxu0 0.0
    %1256 = vmatmul.mubr.f32.gmra.mrb[0].mxu0 %v1186
    %v1257 = vpop.f32.mrb[0].mxu0
    %v1258 = vadd.f32 0.0, %v1257
    %v1259 = vpop.f32.mrb[0].mxu0
    %1260 = vdwg.mxu0
    %v1261 = vadd.f32 %v1138, %v1258
    %v1262 = vld [vmem:[%s0 + $0xa] sm:$0x1]
    %v1263 = vld [vmem:[%s0 + $0x22] sm:$0x1]
    %v1264 = vld [vmem:[%s0 + $0x3a] sm:$0x1]
    %v1265 = vld [vmem:[%s0 + $0x52] sm:$0x1]
    %v1266 = vld [vmem:[%s0 + $0x6a] sm:$0x1]
    %v1267 = vld [vmem:[%s0 + $0x82] sm:$0x1]
    %v1268 = vld [vmem:[%s0 + $0x9a] sm:$0x1]
    %v1269 = vld [vmem:[%s0 + $0xb2] sm:$0x1]
    %s1270 = scalar_lea.vmem %s1, 1280
    %v1271 = vld [vmem:[%s1270] sm:$0xff]
    %v1272 = vld [vmem:[%s1270 + $0x8] sm:$0xff]
    %v1273 = vld [vmem:[%s1270 + $0x10] sm:$0xff]
    %v1274 = vld [vmem:[%s1270 + $0x18] sm:$0xff]
    %v1275 = vld [vmem:[%s1270 + $0x20] sm:$0xff]
    %v1276 = vld [vmem:[%s1270 + $0x28] sm:$0xff]
    %v1277 = vld [vmem:[%s1270 + $0x30] sm:$0xff]
    %v1278 = vld [vmem:[%s1270 + $0x38] sm:$0xff]
    %v1279 = vld [vmem:[%s1270 + $0x40] sm:$0xff]
    %v1280 = vld [vmem:[%s1270 + $0x48] sm:$0xff]
    %v1281 = vld [vmem:[%s1270 + $0x50] sm:$0xff]
    %v1282 = vld [vmem:[%s1270 + $0x58] sm:$0xff]
    %v1283 = vld [vmem:[%s1270 + $0x60] sm:$0xff]
    %v1284 = vld [vmem:[%s1270 + $0x68] sm:$0xff]
    %v1285 = vld [vmem:[%s1270 + $0x70] sm:$0xff]
    %v1286 = vld [vmem:[%s1270 + $0x78] sm:$0xf]
    %v1295 = vrot.slane %v1263, 7
    %v1296 = vsel %vm84, %v1295, %v1262
    %v1297 = vrot.slane %v1264, 6
    %v1298 = vsel %vm87, %v1297, %v1296
    %v1299 = vrot.slane %v1265, 5
    %v1300 = vsel %vm90, %v1299, %v1298
    %v1301 = vrot.slane %v1266, 4
    %v1302 = vsel %vm93, %v1301, %v1300
    %v1303 = vrot.slane %v1267, 3
    %v1304 = vsel %vm96, %v1303, %v1302
    %v1305 = vrot.slane %v1268, 2
    %v1306 = vsel %vm99, %v1305, %v1304
    %v1307 = vrot.slane %v1269, 1
    %v1308 = vsel %vm102, %v1307, %v1306
    %v1309 = vsel %vm104, %v1308, 0
    %v1312 = vsel %vm107, %v1286, 0
    %1314 = vmatprep.subr.mxu0 0.0
    %1315 = vmatpush1.msra.mxu0 %v1271
    %1316 = vmatprep.subr.mxu0 0.0
    %1317 = vmatpush1.msra.mxu0 %v1272
    %1318 = vmatprep.subr.mxu0 0.0
    %1319 = vmatpush1.msra.mxu0 %v1273
    %1320 = vmatprep.subr.mxu0 0.0
    %1321 = vmatpush1.msra.mxu0 %v1274
    %1322 = vmatprep.subr.mxu0 0.0
    %1323 = vmatpush1.msra.mxu0 %v1275
    %1324 = vmatprep.subr.mxu0 0.0
    %1325 = vmatpush1.msra.mxu0 %v1276
    %1326 = vmatprep.subr.mxu0 0.0
    %1327 = vmatpush1.msra.mxu0 %v1277
    %1328 = vmatprep.subr.mxu0 0.0
    %1329 = vmatpush1.msra.mxu0 %v1278
    %1330 = vmatprep.subr.mxu0 0.0
    %1331 = vmatpush1.msra.mxu0 %v1279
    %1332 = vmatprep.subr.mxu0 0.0
    %1333 = vmatpush1.msra.mxu0 %v1280
    %1334 = vmatprep.subr.mxu0 0.0
    %1335 = vmatpush1.msra.mxu0 %v1281
    %1336 = vmatprep.subr.mxu0 0.0
    %1337 = vmatpush1.msra.mxu0 %v1282
    %1338 = vmatprep.subr.mxu0 0.0
    %1339 = vmatpush1.msra.mxu0 %v1283
    %1340 = vmatprep.subr.mxu0 0.0
    %1341 = vmatpush1.msra.mxu0 %v1284
    %1342 = vmatprep.subr.mxu0 0.0
    %1343 = vmatpush1.msra.mxu0 %v1285
    %1344 = vmatprep.subr.mxu0 0.0
    %1345 = vmatpush1.msra.mxu0 %v1312
    %1346 = vmatprep.subr.mxu0 0.0
    %1347 = vmatpush1.msra.mxu0 0.0
    %1348 = vmatprep.subr.mxu0 0.0
    %1349 = vmatpush1.msra.mxu0 0.0
    %1350 = vmatprep.subr.mxu0 0.0
    %1351 = vmatpush1.msra.mxu0 0.0
    %1352 = vmatprep.subr.mxu0 0.0
    %1353 = vmatpush1.msra.mxu0 0.0
    %1354 = vmatprep.subr.mxu0 0.0
    %1355 = vmatpush1.msra.mxu0 0.0
    %1356 = vmatprep.subr.mxu0 0.0
    %1357 = vmatpush1.msra.mxu0 0.0
    %1358 = vmatprep.subr.mxu0 0.0
    %1359 = vmatpush1.msra.mxu0 0.0
    %1360 = vmatprep.subr.mxu0 0.0
    %1361 = vmatpush1.msra.mxu0 0.0
    %1362 = vmatprep.subr.mxu0 0.0
    %1363 = vmatpush1.msra.mxu0 0.0
    %1364 = vmatprep.subr.mxu0 0.0
    %1365 = vmatpush1.msra.mxu0 0.0
    %1366 = vmatprep.subr.mxu0 0.0
    %1367 = vmatpush1.msra.mxu0 0.0
    %1368 = vmatprep.subr.mxu0 0.0
    %1369 = vmatpush1.msra.mxu0 0.0
    %1370 = vmatprep.subr.mxu0 0.0
    %1371 = vmatpush1.msra.mxu0 0.0
    %1372 = vmatprep.subr.mxu0 0.0
    %1373 = vmatpush1.msra.mxu0 0.0
    %1374 = vmatprep.subr.mxu0 0.0
    %1375 = vmatpush1.msra.mxu0 0.0
    %1376 = vmatprep.subr.mxu0 0.0
    %1377 = vmatpush1.msra.mxu0 0.0
    %1378 = vmatprep.mubr.f32.mxu0 0.0
    %1379 = vmatmul.mubr.f32.gmra.mrb[0].mxu0 %v1309
    %v1380 = vpop.f32.mrb[0].mxu0
    %v1381 = vadd.f32 0.0, %v1380
    %v1382 = vpop.f32.mrb[0].mxu0
    %1383 = vdwg.mxu0
    %v1384 = vadd.f32 %v1261, %v1381
    %v1385 = vld [vmem:[%s0 + $0xb] sm:$0x1]
    %v1386 = vld [vmem:[%s0 + $0x23] sm:$0x1]
    %v1387 = vld [vmem:[%s0 + $0x3b] sm:$0x1]
    %v1388 = vld [vmem:[%s0 + $0x53] sm:$0x1]
    %v1389 = vld [vmem:[%s0 + $0x6b] sm:$0x1]
    %v1390 = vld [vmem:[%s0 + $0x83] sm:$0x1]
    %v1391 = vld [vmem:[%s0 + $0x9b] sm:$0x1]
    %v1392 = vld [vmem:[%s0 + $0xb3] sm:$0x1]
    %s1393 = scalar_lea.vmem %s1, 1408
    %v1394 = vld [vmem:[%s1393] sm:$0xff]
    %v1395 = vld [vmem:[%s1393 + $0x8] sm:$0xff]
    %v1396 = vld [vmem:[%s1393 + $0x10] sm:$0xff]
    %v1397 = vld [vmem:[%s1393 + $0x18] sm:$0xff]
    %v1398 = vld [vmem:[%s1393 + $0x20] sm:$0xff]
    %v1399 = vld [vmem:[%s1393 + $0x28] sm:$0xff]
    %v1400 = vld [vmem:[%s1393 + $0x30] sm:$0xff]
    %v1401 = vld [vmem:[%s1393 + $0x38] sm:$0xff]
    %v1402 = vld [vmem:[%s1393 + $0x40] sm:$0xff]
    %v1403 = vld [vmem:[%s1393 + $0x48] sm:$0xff]
    %v1404 = vld [vmem:[%s1393 + $0x50] sm:$0xff]
    %v1405 = vld [vmem:[%s1393 + $0x58] sm:$0xff]
    %v1406 = vld [vmem:[%s1393 + $0x60] sm:$0xff]
    %v1407 = vld [vmem:[%s1393 + $0x68] sm:$0xff]
    %v1408 = vld [vmem:[%s1393 + $0x70] sm:$0xff]
    %v1409 = vld [vmem:[%s1393 + $0x78] sm:$0xf]
    %v1418 = vrot.slane %v1386, 7
    %v1419 = vsel %vm84, %v1418, %v1385
    %v1420 = vrot.slane %v1387, 6
    %v1421 = vsel %vm87, %v1420, %v1419
    %v1422 = vrot.slane %v1388, 5
    %v1423 = vsel %vm90, %v1422, %v1421
    %v1424 = vrot.slane %v1389, 4
    %v1425 = vsel %vm93, %v1424, %v1423
    %v1426 = vrot.slane %v1390, 3
    %v1427 = vsel %vm96, %v1426, %v1425
    %v1428 = vrot.slane %v1391, 2
    %v1429 = vsel %vm99, %v1428, %v1427
    %v1430 = vrot.slane %v1392, 1
    %v1431 = vsel %vm102, %v1430, %v1429
    %v1432 = vsel %vm104, %v1431, 0
    %v1435 = vsel %vm107, %v1409, 0
    %1437 = vmatprep.subr.mxu0 0.0
    %1438 = vmatpush1.msra.mxu0 %v1394
    %1439 = vmatprep.subr.mxu0 0.0
    %1440 = vmatpush1.msra.mxu0 %v1395
    %1441 = vmatprep.subr.mxu0 0.0
    %1442 = vmatpush1.msra.mxu0 %v1396
    %1443 = vmatprep.subr.mxu0 0.0
    %1444 = vmatpush1.msra.mxu0 %v1397
    %1445 = vmatprep.subr.mxu0 0.0
    %1446 = vmatpush1.msra.mxu0 %v1398
    %1447 = vmatprep.subr.mxu0 0.0
    %1448 = vmatpush1.msra.mxu0 %v1399
    %1449 = vmatprep.subr.mxu0 0.0
    %1450 = vmatpush1.msra.mxu0 %v1400
    %1451 = vmatprep.subr.mxu0 0.0
    %1452 = vmatpush1.msra.mxu0 %v1401
    %1453 = vmatprep.subr.mxu0 0.0
    %1454 = vmatpush1.msra.mxu0 %v1402
    %1455 = vmatprep.subr.mxu0 0.0
    %1456 = vmatpush1.msra.mxu0 %v1403
    %1457 = vmatprep.subr.mxu0 0.0
    %1458 = vmatpush1.msra.mxu0 %v1404
    %1459 = vmatprep.subr.mxu0 0.0
    %1460 = vmatpush1.msra.mxu0 %v1405
    %1461 = vmatprep.subr.mxu0 0.0
    %1462 = vmatpush1.msra.mxu0 %v1406
    %1463 = vmatprep.subr.mxu0 0.0
    %1464 = vmatpush1.msra.mxu0 %v1407
    %1465 = vmatprep.subr.mxu0 0.0
    %1466 = vmatpush1.msra.mxu0 %v1408
    %1467 = vmatprep.subr.mxu0 0.0
    %1468 = vmatpush1.msra.mxu0 %v1435
    %1469 = vmatprep.subr.mxu0 0.0
    %1470 = vmatpush1.msra.mxu0 0.0
    %1471 = vmatprep.subr.mxu0 0.0
    %1472 = vmatpush1.msra.mxu0 0.0
    %1473 = vmatprep.subr.mxu0 0.0
    %1474 = vmatpush1.msra.mxu0 0.0
    %1475 = vmatprep.subr.mxu0 0.0
    %1476 = vmatpush1.msra.mxu0 0.0
    %1477 = vmatprep.subr.mxu0 0.0
    %1478 = vmatpush1.msra.mxu0 0.0
    %1479 = vmatprep.subr.mxu0 0.0
    %1480 = vmatpush1.msra.mxu0 0.0
    %1481 = vmatprep.subr.mxu0 0.0
    %1482 = vmatpush1.msra.mxu0 0.0
    %1483 = vmatprep.subr.mxu0 0.0
    %1484 = vmatpush1.msra.mxu0 0.0
    %1485 = vmatprep.subr.mxu0 0.0
    %1486 = vmatpush1.msra.mxu0 0.0
    %1487 = vmatprep.subr.mxu0 0.0
    %1488 = vmatpush1.msra.mxu0 0.0
    %1489 = vmatprep.subr.mxu0 0.0
    %1490 = vmatpush1.msra.mxu0 0.0
    %1491 = vmatprep.subr.mxu0 0.0
    %1492 = vmatpush1.msra.mxu0 0.0
    %1493 = vmatprep.subr.mxu0 0.0
    %1494 = vmatpush1.msra.mxu0 0.0
    %1495 = vmatprep.subr.mxu0 0.0
    %1496 = vmatpush1.msra.mxu0 0.0
    %1497 = vmatprep.subr.mxu0 0.0
    %1498 = vmatpush1.msra.mxu0 0.0
    %1499 = vmatprep.subr.mxu0 0.0
    %1500 = vmatpush1.msra.mxu0 0.0
    %1501 = vmatprep.mubr.f32.mxu0 0.0
    %1502 = vmatmul.mubr.f32.gmra.mrb[0].mxu0 %v1432
    %v1503 = vpop.f32.mrb[0].mxu0
    %v1504 = vadd.f32 0.0, %v1503
    %v1505 = vpop.f32.mrb[0].mxu0
    %1506 = vdwg.mxu0
    %v1507 = vadd.f32 %v1384, %v1504
    %v1508 = vld [vmem:[%s0 + $0xc] sm:$0x1]
    %v1509 = vld [vmem:[%s0 + $0x24] sm:$0x1]
    %v1510 = vld [vmem:[%s0 + $0x3c] sm:$0x1]
    %v1511 = vld [vmem:[%s0 + $0x54] sm:$0x1]
    %v1512 = vld [vmem:[%s0 + $0x6c] sm:$0x1]
    %v1513 = vld [vmem:[%s0 + $0x84] sm:$0x1]
    %v1514 = vld [vmem:[%s0 + $0x9c] sm:$0x1]
    %v1515 = vld [vmem:[%s0 + $0xb4] sm:$0x1]
    %s1516 = scalar_lea.vmem %s1, 1536
    %v1517 = vld [vmem:[%s1516] sm:$0xff]
    %v1518 = vld [vmem:[%s1516 + $0x8] sm:$0xff]
    %v1519 = vld [vmem:[%s1516 + $0x10] sm:$0xff]
    %v1520 = vld [vmem:[%s1516 + $0x18] sm:$0xff]
    %v1521 = vld [vmem:[%s1516 + $0x20] sm:$0xff]
    %v1522 = vld [vmem:[%s1516 + $0x28] sm:$0xff]
    %v1523 = vld [vmem:[%s1516 + $0x30] sm:$0xff]
    %v1524 = vld [vmem:[%s1516 + $0x38] sm:$0xff]
    %v1525 = vld [vmem:[%s1516 + $0x40] sm:$0xff]
    %v1526 = vld [vmem:[%s1516 + $0x48] sm:$0xff]
    %v1527 = vld [vmem:[%s1516 + $0x50] sm:$0xff]
    %v1528 = vld [vmem:[%s1516 + $0x58] sm:$0xff]
    %v1529 = vld [vmem:[%s1516 + $0x60] sm:$0xff]
    %v1530 = vld [vmem:[%s1516 + $0x68] sm:$0xff]
    %v1531 = vld [vmem:[%s1516 + $0x70] sm:$0xff]
    %v1532 = vld [vmem:[%s1516 + $0x78] sm:$0xf]
    %v1541 = vrot.slane %v1509, 7
    %v1542 = vsel %vm84, %v1541, %v1508
    %v1543 = vrot.slane %v1510, 6
    %v1544 = vsel %vm87, %v1543, %v1542
    %v1545 = vrot.slane %v1511, 5
    %v1546 = vsel %vm90, %v1545, %v1544
    %v1547 = vrot.slane %v1512, 4
    %v1548 = vsel %vm93, %v1547, %v1546
    %v1549 = vrot.slane %v1513, 3
    %v1550 = vsel %vm96, %v1549, %v1548
    %v1551 = vrot.slane %v1514, 2
    %v1552 = vsel %vm99, %v1551, %v1550
    %v1553 = vrot.slane %v1515, 1
    %v1554 = vsel %vm102, %v1553, %v1552
    %v1555 = vsel %vm104, %v1554, 0
    %v1558 = vsel %vm107, %v1532, 0
    %1560 = vmatprep.subr.mxu0 0.0
    %1561 = vmatpush1.msra.mxu0 %v1517
    %1562 = vmatprep.subr.mxu0 0.0
    %1563 = vmatpush1.msra.mxu0 %v1518
    %1564 = vmatprep.subr.mxu0 0.0
    %1565 = vmatpush1.msra.mxu0 %v1519
    %1566 = vmatprep.subr.mxu0 0.0
    %1567 = vmatpush1.msra.mxu0 %v1520
    %1568 = vmatprep.subr.mxu0 0.0
    %1569 = vmatpush1.msra.mxu0 %v1521
    %1570 = vmatprep.subr.mxu0 0.0
    %1571 = vmatpush1.msra.mxu0 %v1522
    %1572 = vmatprep.subr.mxu0 0.0
    %1573 = vmatpush1.msra.mxu0 %v1523
    %1574 = vmatprep.subr.mxu0 0.0
    %1575 = vmatpush1.msra.mxu0 %v1524
    %1576 = vmatprep.subr.mxu0 0.0
    %1577 = vmatpush1.msra.mxu0 %v1525
    %1578 = vmatprep.subr.mxu0 0.0
    %1579 = vmatpush1.msra.mxu0 %v1526
    %1580 = vmatprep.subr.mxu0 0.0
    %1581 = vmatpush1.msra.mxu0 %v1527
    %1582 = vmatprep.subr.mxu0 0.0
    %1583 = vmatpush1.msra.mxu0 %v1528
    %1584 = vmatprep.subr.mxu0 0.0
    %1585 = vmatpush1.msra.mxu0 %v1529
    %1586 = vmatprep.subr.mxu0 0.0
    %1587 = vmatpush1.msra.mxu0 %v1530
    %1588 = vmatprep.subr.mxu0 0.0
    %1589 = vmatpush1.msra.mxu0 %v1531
    %1590 = vmatprep.subr.mxu0 0.0
    %1591 = vmatpush1.msra.mxu0 %v1558
    %1592 = vmatprep.subr.mxu0 0.0
    %1593 = vmatpush1.msra.mxu0 0.0
    %1594 = vmatprep.subr.mxu0 0.0
    %1595 = vmatpush1.msra.mxu0 0.0
    %1596 = vmatprep.subr.mxu0 0.0
    %1597 = vmatpush1.msra.mxu0 0.0
    %1598 = vmatprep.subr.mxu0 0.0
    %1599 = vmatpush1.msra.mxu0 0.0
    %1600 = vmatprep.subr.mxu0 0.0
    %1601 = vmatpush1.msra.mxu0 0.0
    %1602 = vmatprep.subr.mxu0 0.0
    %1603 = vmatpush1.msra.mxu0 0.0
    %1604 = vmatprep.subr.mxu0 0.0
    %1605 = vmatpush1.msra.mxu0 0.0
    %1606 = vmatprep.subr.mxu0 0.0
    %1607 = vmatpush1.msra.mxu0 0.0
    %1608 = vmatprep.subr.mxu0 0.0
    %1609 = vmatpush1.msra.mxu0 0.0
    %1610 = vmatprep.subr.mxu0 0.0
    %1611 = vmatpush1.msra.mxu0 0.0
    %1612 = vmatprep.subr.mxu0 0.0
    %1613 = vmatpush1.msra.mxu0 0.0
    %1614 = vmatprep.subr.mxu0 0.0
    %1615 = vmatpush1.msra.mxu0 0.0
    %1616 = vmatprep.subr.mxu0 0.0
    %1617 = vmatpush1.msra.mxu0 0.0
    %1618 = vmatprep.subr.mxu0 0.0
    %1619 = vmatpush1.msra.mxu0 0.0
    %1620 = vmatprep.subr.mxu0 0.0
    %1621 = vmatpush1.msra.mxu0 0.0
    %1622 = vmatprep.subr.mxu0 0.0
    %1623 = vmatpush1.msra.mxu0 0.0
    %1624 = vmatprep.mubr.f32.mxu0 0.0
    %1625 = vmatmul.mubr.f32.gmra.mrb[0].mxu0 %v1555
    %v1626 = vpop.f32.mrb[0].mxu0
    %v1627 = vadd.f32 0.0, %v1626
    %v1628 = vpop.f32.mrb[0].mxu0
    %1629 = vdwg.mxu0
    %v1630 = vadd.f32 %v1507, %v1627
    %v1631 = vld [vmem:[%s0 + $0xd] sm:$0x1]
    %v1632 = vld [vmem:[%s0 + $0x25] sm:$0x1]
    %v1633 = vld [vmem:[%s0 + $0x3d] sm:$0x1]
    %v1634 = vld [vmem:[%s0 + $0x55] sm:$0x1]
    %v1635 = vld [vmem:[%s0 + $0x6d] sm:$0x1]
    %v1636 = vld [vmem:[%s0 + $0x85] sm:$0x1]
    %v1637 = vld [vmem:[%s0 + $0x9d] sm:$0x1]
    %v1638 = vld [vmem:[%s0 + $0xb5] sm:$0x1]
    %s1639 = scalar_lea.vmem %s1, 1664
    %v1640 = vld [vmem:[%s1639] sm:$0xff]
    %v1641 = vld [vmem:[%s1639 + $0x8] sm:$0xff]
    %v1642 = vld [vmem:[%s1639 + $0x10] sm:$0xff]
    %v1643 = vld [vmem:[%s1639 + $0x18] sm:$0xff]
    %v1644 = vld [vmem:[%s1639 + $0x20] sm:$0xff]
    %v1645 = vld [vmem:[%s1639 + $0x28] sm:$0xff]
    %v1646 = vld [vmem:[%s1639 + $0x30] sm:$0xff]
    %v1647 = vld [vmem:[%s1639 + $0x38] sm:$0xff]
    %v1648 = vld [vmem:[%s1639 + $0x40] sm:$0xff]
    %v1649 = vld [vmem:[%s1639 + $0x48] sm:$0xff]
    %v1650 = vld [vmem:[%s1639 + $0x50] sm:$0xff]
    %v1651 = vld [vmem:[%s1639 + $0x58] sm:$0xff]
    %v1652 = vld [vmem:[%s1639 + $0x60] sm:$0xff]
    %v1653 = vld [vmem:[%s1639 + $0x68] sm:$0xff]
    %v1654 = vld [vmem:[%s1639 + $0x70] sm:$0xff]
    %v1655 = vld [vmem:[%s1639 + $0x78] sm:$0xf]
    %v1664 = vrot.slane %v1632, 7
    %v1665 = vsel %vm84, %v1664, %v1631
    %v1666 = vrot.slane %v1633, 6
    %v1667 = vsel %vm87, %v1666, %v1665
    %v1668 = vrot.slane %v1634, 5
    %v1669 = vsel %vm90, %v1668, %v1667
    %v1670 = vrot.slane %v1635, 4
    %v1671 = vsel %vm93, %v1670, %v1669
    %v1672 = vrot.slane %v1636, 3
    %v1673 = vsel %vm96, %v1672, %v1671
    %v1674 = vrot.slane %v1637, 2
    %v1675 = vsel %vm99, %v1674, %v1673
    %v1676 = vrot.slane %v1638, 1
    %v1677 = vsel %vm102, %v1676, %v1675
    %v1678 = vsel %vm104, %v1677, 0
    %v1681 = vsel %vm107, %v1655, 0
    %1683 = vmatprep.subr.mxu0 0.0
    %1684 = vmatpush1.msra.mxu0 %v1640
    %1685 = vmatprep.subr.mxu0 0.0
    %1686 = vmatpush1.msra.mxu0 %v1641
    %1687 = vmatprep.subr.mxu0 0.0
    %1688 = vmatpush1.msra.mxu0 %v1642
    %1689 = vmatprep.subr.mxu0 0.0
    %1690 = vmatpush1.msra.mxu0 %v1643
    %1691 = vmatprep.subr.mxu0 0.0
    %1692 = vmatpush1.msra.mxu0 %v1644
    %1693 = vmatprep.subr.mxu0 0.0
    %1694 = vmatpush1.msra.mxu0 %v1645
    %1695 = vmatprep.subr.mxu0 0.0
    %1696 = vmatpush1.msra.mxu0 %v1646
    %1697 = vmatprep.subr.mxu0 0.0
    %1698 = vmatpush1.msra.mxu0 %v1647
    %1699 = vmatprep.subr.mxu0 0.0
    %1700 = vmatpush1.msra.mxu0 %v1648
    %1701 = vmatprep.subr.mxu0 0.0
    %1702 = vmatpush1.msra.mxu0 %v1649
    %1703 = vmatprep.subr.mxu0 0.0
    %1704 = vmatpush1.msra.mxu0 %v1650
    %1705 = vmatprep.subr.mxu0 0.0
    %1706 = vmatpush1.msra.mxu0 %v1651
    %1707 = vmatprep.subr.mxu0 0.0
    %1708 = vmatpush1.msra.mxu0 %v1652
    %1709 = vmatprep.subr.mxu0 0.0
    %1710 = vmatpush1.msra.mxu0 %v1653
    %1711 = vmatprep.subr.mxu0 0.0
    %1712 = vmatpush1.msra.mxu0 %v1654
    %1713 = vmatprep.subr.mxu0 0.0
    %1714 = vmatpush1.msra.mxu0 %v1681
    %1715 = vmatprep.subr.mxu0 0.0
    %1716 = vmatpush1.msra.mxu0 0.0
    %1717 = vmatprep.subr.mxu0 0.0
    %1718 = vmatpush1.msra.mxu0 0.0
    %1719 = vmatprep.subr.mxu0 0.0
    %1720 = vmatpush1.msra.mxu0 0.0
    %1721 = vmatprep.subr.mxu0 0.0
    %1722 = vmatpush1.msra.mxu0 0.0
    %1723 = vmatprep.subr.mxu0 0.0
    %1724 = vmatpush1.msra.mxu0 0.0
    %1725 = vmatprep.subr.mxu0 0.0
    %1726 = vmatpush1.msra.mxu0 0.0
    %1727 = vmatprep.subr.mxu0 0.0
    %1728 = vmatpush1.msra.mxu0 0.0
    %1729 = vmatprep.subr.mxu0 0.0
    %1730 = vmatpush1.msra.mxu0 0.0
    %1731 = vmatprep.subr.mxu0 0.0
    %1732 = vmatpush1.msra.mxu0 0.0
    %1733 = vmatprep.subr.mxu0 0.0
    %1734 = vmatpush1.msra.mxu0 0.0
    %1735 = vmatprep.subr.mxu0 0.0
    %1736 = vmatpush1.msra.mxu0 0.0
    %1737 = vmatprep.subr.mxu0 0.0
    %1738 = vmatpush1.msra.mxu0 0.0
    %1739 = vmatprep.subr.mxu0 0.0
    %1740 = vmatpush1.msra.mxu0 0.0
    %1741 = vmatprep.subr.mxu0 0.0
    %1742 = vmatpush1.msra.mxu0 0.0
    %1743 = vmatprep.subr.mxu0 0.0
    %1744 = vmatpush1.msra.mxu0 0.0
    %1745 = vmatprep.subr.mxu0 0.0
    %1746 = vmatpush1.msra.mxu0 0.0
    %1747 = vmatprep.mubr.f32.mxu0 0.0
    %1748 = vmatmul.mubr.f32.gmra.mrb[0].mxu0 %v1678
    %v1749 = vpop.f32.mrb[0].mxu0
    %v1750 = vadd.f32 0.0, %v1749
    %v1751 = vpop.f32.mrb[0].mxu0
    %1752 = vdwg.mxu0
    %v1753 = vadd.f32 %v1630, %v1750
    %v1754 = vld [vmem:[%s0 + $0xe] sm:$0x1]
    %v1755 = vld [vmem:[%s0 + $0x26] sm:$0x1]
    %v1756 = vld [vmem:[%s0 + $0x3e] sm:$0x1]
    %v1757 = vld [vmem:[%s0 + $0x56] sm:$0x1]
    %v1758 = vld [vmem:[%s0 + $0x6e] sm:$0x1]
    %v1759 = vld [vmem:[%s0 + $0x86] sm:$0x1]
    %v1760 = vld [vmem:[%s0 + $0x9e] sm:$0x1]
    %v1761 = vld [vmem:[%s0 + $0xb6] sm:$0x1]
    %s1762 = scalar_lea.vmem %s1, 1792
    %v1763 = vld [vmem:[%s1762] sm:$0xff]
    %v1764 = vld [vmem:[%s1762 + $0x8] sm:$0xff]
    %v1765 = vld [vmem:[%s1762 + $0x10] sm:$0xff]
    %v1766 = vld [vmem:[%s1762 + $0x18] sm:$0xff]
    %v1767 = vld [vmem:[%s1762 + $0x20] sm:$0xff]
    %v1768 = vld [vmem:[%s1762 + $0x28] sm:$0xff]
    %v1769 = vld [vmem:[%s1762 + $0x30] sm:$0xff]
    %v1770 = vld [vmem:[%s1762 + $0x38] sm:$0xff]
    %v1771 = vld [vmem:[%s1762 + $0x40] sm:$0xff]
    %v1772 = vld [vmem:[%s1762 + $0x48] sm:$0xff]
    %v1773 = vld [vmem:[%s1762 + $0x50] sm:$0xff]
    %v1774 = vld [vmem:[%s1762 + $0x58] sm:$0xff]
    %v1775 = vld [vmem:[%s1762 + $0x60] sm:$0xff]
    %v1776 = vld [vmem:[%s1762 + $0x68] sm:$0xff]
    %v1777 = vld [vmem:[%s1762 + $0x70] sm:$0xff]
    %v1778 = vld [vmem:[%s1762 + $0x78] sm:$0xf]
    %v1787 = vrot.slane %v1755, 7
    %v1788 = vsel %vm84, %v1787, %v1754
    %v1789 = vrot.slane %v1756, 6
    %v1790 = vsel %vm87, %v1789, %v1788
    %v1791 = vrot.slane %v1757, 5
    %v1792 = vsel %vm90, %v1791, %v1790
    %v1793 = vrot.slane %v1758, 4
    %v1794 = vsel %vm93, %v1793, %v1792
    %v1795 = vrot.slane %v1759, 3
    %v1796 = vsel %vm96, %v1795, %v1794
    %v1797 = vrot.slane %v1760, 2
    %v1798 = vsel %vm99, %v1797, %v1796
    %v1799 = vrot.slane %v1761, 1
    %v1800 = vsel %vm102, %v1799, %v1798
    %v1801 = vsel %vm104, %v1800, 0
    %v1804 = vsel %vm107, %v1778, 0
    %1806 = vmatprep.subr.mxu0 0.0
    %1807 = vmatpush1.msra.mxu0 %v1763
    %1808 = vmatprep.subr.mxu0 0.0
    %1809 = vmatpush1.msra.mxu0 %v1764
    %1810 = vmatprep.subr.mxu0 0.0
    %1811 = vmatpush1.msra.mxu0 %v1765
    %1812 = vmatprep.subr.mxu0 0.0
    %1813 = vmatpush1.msra.mxu0 %v1766
    %1814 = vmatprep.subr.mxu0 0.0
    %1815 = vmatpush1.msra.mxu0 %v1767
    %1816 = vmatprep.subr.mxu0 0.0
    %1817 = vmatpush1.msra.mxu0 %v1768
    %1818 = vmatprep.subr.mxu0 0.0
    %1819 = vmatpush1.msra.mxu0 %v1769
    %1820 = vmatprep.subr.mxu0 0.0
    %1821 = vmatpush1.msra.mxu0 %v1770
    %1822 = vmatprep.subr.mxu0 0.0
    %1823 = vmatpush1.msra.mxu0 %v1771
    %1824 = vmatprep.subr.mxu0 0.0
    %1825 = vmatpush1.msra.mxu0 %v1772
    %1826 = vmatprep.subr.mxu0 0.0
    %1827 = vmatpush1.msra.mxu0 %v1773
    %1828 = vmatprep.subr.mxu0 0.0
    %1829 = vmatpush1.msra.mxu0 %v1774
    %1830 = vmatprep.subr.mxu0 0.0
    %1831 = vmatpush1.msra.mxu0 %v1775
    %1832 = vmatprep.subr.mxu0 0.0
    %1833 = vmatpush1.msra.mxu0 %v1776
    %1834 = vmatprep.subr.mxu0 0.0
    %1835 = vmatpush1.msra.mxu0 %v1777
    %1836 = vmatprep.subr.mxu0 0.0
    %1837 = vmatpush1.msra.mxu0 %v1804
    %1838 = vmatprep.subr.mxu0 0.0
    %1839 = vmatpush1.msra.mxu0 0.0
    %1840 = vmatprep.subr.mxu0 0.0
    %1841 = vmatpush1.msra.mxu0 0.0
    %1842 = vmatprep.subr.mxu0 0.0
    %1843 = vmatpush1.msra.mxu0 0.0
    %1844 = vmatprep.subr.mxu0 0.0
    %1845 = vmatpush1.msra.mxu0 0.0
    %1846 = vmatprep.subr.mxu0 0.0
    %1847 = vmatpush1.msra.mxu0 0.0
    %1848 = vmatprep.subr.mxu0 0.0
    %1849 = vmatpush1.msra.mxu0 0.0
    %1850 = vmatprep.subr.mxu0 0.0
    %1851 = vmatpush1.msra.mxu0 0.0
    %1852 = vmatprep.subr.mxu0 0.0
    %1853 = vmatpush1.msra.mxu0 0.0
    %1854 = vmatprep.subr.mxu0 0.0
    %1855 = vmatpush1.msra.mxu0 0.0
    %1856 = vmatprep.subr.mxu0 0.0
    %1857 = vmatpush1.msra.mxu0 0.0
    %1858 = vmatprep.subr.mxu0 0.0
    %1859 = vmatpush1.msra.mxu0 0.0
    %1860 = vmatprep.subr.mxu0 0.0
    %1861 = vmatpush1.msra.mxu0 0.0
    %1862 = vmatprep.subr.mxu0 0.0
    %1863 = vmatpush1.msra.mxu0 0.0
    %1864 = vmatprep.subr.mxu0 0.0
    %1865 = vmatpush1.msra.mxu0 0.0
    %1866 = vmatprep.subr.mxu0 0.0
    %1867 = vmatpush1.msra.mxu0 0.0
    %1868 = vmatprep.subr.mxu0 0.0
    %1869 = vmatpush1.msra.mxu0 0.0
    %1870 = vmatprep.mubr.f32.mxu0 0.0
    %1871 = vmatmul.mubr.f32.gmra.mrb[0].mxu0 %v1801
    %v1872 = vpop.f32.mrb[0].mxu0
    %v1873 = vadd.f32 0.0, %v1872
    %v1874 = vpop.f32.mrb[0].mxu0
    %1875 = vdwg.mxu0
    %v1876 = vadd.f32 %v1753, %v1873
    %v1877 = vld [vmem:[%s0 + $0xf] sm:$0x1]
    %v1878 = vld [vmem:[%s0 + $0x27] sm:$0x1]
    %v1879 = vld [vmem:[%s0 + $0x3f] sm:$0x1]
    %v1880 = vld [vmem:[%s0 + $0x57] sm:$0x1]
    %v1881 = vld [vmem:[%s0 + $0x6f] sm:$0x1]
    %v1882 = vld [vmem:[%s0 + $0x87] sm:$0x1]
    %v1883 = vld [vmem:[%s0 + $0x9f] sm:$0x1]
    %v1884 = vld [vmem:[%s0 + $0xb7] sm:$0x1]
    %s1885 = scalar_lea.vmem %s1, 1920
    %v1886 = vld [vmem:[%s1885] sm:$0xff]
    %v1887 = vld [vmem:[%s1885 + $0x8] sm:$0xff]
    %v1888 = vld [vmem:[%s1885 + $0x10] sm:$0xff]
    %v1889 = vld [vmem:[%s1885 + $0x18] sm:$0xff]
    %v1890 = vld [vmem:[%s1885 + $0x20] sm:$0xff]
    %v1891 = vld [vmem:[%s1885 + $0x28] sm:$0xff]
    %v1892 = vld [vmem:[%s1885 + $0x30] sm:$0xff]
    %v1893 = vld [vmem:[%s1885 + $0x38] sm:$0xff]
    %v1894 = vld [vmem:[%s1885 + $0x40] sm:$0xff]
    %v1895 = vld [vmem:[%s1885 + $0x48] sm:$0xff]
    %v1896 = vld [vmem:[%s1885 + $0x50] sm:$0xff]
    %v1897 = vld [vmem:[%s1885 + $0x58] sm:$0xff]
    %v1898 = vld [vmem:[%s1885 + $0x60] sm:$0xff]
    %v1899 = vld [vmem:[%s1885 + $0x68] sm:$0xff]
    %v1900 = vld [vmem:[%s1885 + $0x70] sm:$0xff]
    %v1901 = vld [vmem:[%s1885 + $0x78] sm:$0xf]
    %v1910 = vrot.slane %v1878, 7
    %v1911 = vsel %vm84, %v1910, %v1877
    %v1912 = vrot.slane %v1879, 6
    %v1913 = vsel %vm87, %v1912, %v1911
    %v1914 = vrot.slane %v1880, 5
    %v1915 = vsel %vm90, %v1914, %v1913
    %v1916 = vrot.slane %v1881, 4
    %v1917 = vsel %vm93, %v1916, %v1915
    %v1918 = vrot.slane %v1882, 3
    %v1919 = vsel %vm96, %v1918, %v1917
    %v1920 = vrot.slane %v1883, 2
    %v1921 = vsel %vm99, %v1920, %v1919
    %v1922 = vrot.slane %v1884, 1
    %v1923 = vsel %vm102, %v1922, %v1921
    %v1924 = vsel %vm104, %v1923, 0
    %v1927 = vsel %vm107, %v1901, 0
    %1929 = vmatprep.subr.mxu0 0.0
    %1930 = vmatpush1.msra.mxu0 %v1886
    %1931 = vmatprep.subr.mxu0 0.0
    %1932 = vmatpush1.msra.mxu0 %v1887
    %1933 = vmatprep.subr.mxu0 0.0
    %1934 = vmatpush1.msra.mxu0 %v1888
    %1935 = vmatprep.subr.mxu0 0.0
    %1936 = vmatpush1.msra.mxu0 %v1889
    %1937 = vmatprep.subr.mxu0 0.0
    %1938 = vmatpush1.msra.mxu0 %v1890
    %1939 = vmatprep.subr.mxu0 0.0
    %1940 = vmatpush1.msra.mxu0 %v1891
    %1941 = vmatprep.subr.mxu0 0.0
    %1942 = vmatpush1.msra.mxu0 %v1892
    %1943 = vmatprep.subr.mxu0 0.0
    %1944 = vmatpush1.msra.mxu0 %v1893
    %1945 = vmatprep.subr.mxu0 0.0
    %1946 = vmatpush1.msra.mxu0 %v1894
    %1947 = vmatprep.subr.mxu0 0.0
    %1948 = vmatpush1.msra.mxu0 %v1895
    %1949 = vmatprep.subr.mxu0 0.0
    %1950 = vmatpush1.msra.mxu0 %v1896
    %1951 = vmatprep.subr.mxu0 0.0
    %1952 = vmatpush1.msra.mxu0 %v1897
    %1953 = vmatprep.subr.mxu0 0.0
    %1954 = vmatpush1.msra.mxu0 %v1898
    %1955 = vmatprep.subr.mxu0 0.0
    %1956 = vmatpush1.msra.mxu0 %v1899
    %1957 = vmatprep.subr.mxu0 0.0
    %1958 = vmatpush1.msra.mxu0 %v1900
    %1959 = vmatprep.subr.mxu0 0.0
    %1960 = vmatpush1.msra.mxu0 %v1927
    %1961 = vmatprep.subr.mxu0 0.0
    %1962 = vmatpush1.msra.mxu0 0.0
    %1963 = vmatprep.subr.mxu0 0.0
    %1964 = vmatpush1.msra.mxu0 0.0
    %1965 = vmatprep.subr.mxu0 0.0
    %1966 = vmatpush1.msra.mxu0 0.0
    %1967 = vmatprep.subr.mxu0 0.0
    %1968 = vmatpush1.msra.mxu0 0.0
    %1969 = vmatprep.subr.mxu0 0.0
    %1970 = vmatpush1.msra.mxu0 0.0
    %1971 = vmatprep.subr.mxu0 0.0
    %1972 = vmatpush1.msra.mxu0 0.0
    %1973 = vmatprep.subr.mxu0 0.0
    %1974 = vmatpush1.msra.mxu0 0.0
    %1975 = vmatprep.subr.mxu0 0.0
    %1976 = vmatpush1.msra.mxu0 0.0
    %1977 = vmatprep.subr.mxu0 0.0
    %1978 = vmatpush1.msra.mxu0 0.0
    %1979 = vmatprep.subr.mxu0 0.0
    %1980 = vmatpush1.msra.mxu0 0.0
    %1981 = vmatprep.subr.mxu0 0.0
    %1982 = vmatpush1.msra.mxu0 0.0
    %1983 = vmatprep.subr.mxu0 0.0
    %1984 = vmatpush1.msra.mxu0 0.0
    %1985 = vmatprep.subr.mxu0 0.0
    %1986 = vmatpush1.msra.mxu0 0.0
    %1987 = vmatprep.subr.mxu0 0.0
    %1988 = vmatpush1.msra.mxu0 0.0
    %1989 = vmatprep.subr.mxu0 0.0
    %1990 = vmatpush1.msra.mxu0 0.0
    %1991 = vmatprep.subr.mxu0 0.0
    %1992 = vmatpush1.msra.mxu0 0.0
    %1993 = vmatprep.mubr.f32.mxu0 0.0
    %1994 = vmatmul.mubr.f32.gmra.mrb[0].mxu0 %v1924
    %v1995 = vpop.f32.mrb[0].mxu0
    %v1996 = vadd.f32 0.0, %v1995
    %v1997 = vpop.f32.mrb[0].mxu0
    %1998 = vdwg.mxu0
    %v1999 = vadd.f32 %v1876, %v1996
    %v2000 = vld [vmem:[%s0 + $0x10] sm:$0x1]
    %v2001 = vld [vmem:[%s0 + $0x28] sm:$0x1]
    %v2002 = vld [vmem:[%s0 + $0x40] sm:$0x1]
    %v2003 = vld [vmem:[%s0 + $0x58] sm:$0x1]
    %v2004 = vld [vmem:[%s0 + $0x70] sm:$0x1]
    %v2005 = vld [vmem:[%s0 + $0x88] sm:$0x1]
    %v2006 = vld [vmem:[%s0 + $0xa0] sm:$0x1]
    %v2007 = vld [vmem:[%s0 + $0xb8] sm:$0x1]
    %s2008 = scalar_lea.vmem %s1, 2048
    %v2009 = vld [vmem:[%s2008] sm:$0xff]
    %v2010 = vld [vmem:[%s2008 + $0x8] sm:$0xff]
    %v2011 = vld [vmem:[%s2008 + $0x10] sm:$0xff]
    %v2012 = vld [vmem:[%s2008 + $0x18] sm:$0xff]
    %v2013 = vld [vmem:[%s2008 + $0x20] sm:$0xff]
    %v2014 = vld [vmem:[%s2008 + $0x28] sm:$0xff]
    %v2015 = vld [vmem:[%s2008 + $0x30] sm:$0xff]
    %v2016 = vld [vmem:[%s2008 + $0x38] sm:$0xff]
    %v2017 = vld [vmem:[%s2008 + $0x40] sm:$0xff]
    %v2018 = vld [vmem:[%s2008 + $0x48] sm:$0xff]
    %v2019 = vld [vmem:[%s2008 + $0x50] sm:$0xff]
    %v2020 = vld [vmem:[%s2008 + $0x58] sm:$0xff]
    %v2021 = vld [vmem:[%s2008 + $0x60] sm:$0xff]
    %v2022 = vld [vmem:[%s2008 + $0x68] sm:$0xff]
    %v2023 = vld [vmem:[%s2008 + $0x70] sm:$0xff]
    %v2024 = vld [vmem:[%s2008 + $0x78] sm:$0xf]
    %v2033 = vrot.slane %v2001, 7
    %v2034 = vsel %vm84, %v2033, %v2000
    %v2035 = vrot.slane %v2002, 6
    %v2036 = vsel %vm87, %v2035, %v2034
    %v2037 = vrot.slane %v2003, 5
    %v2038 = vsel %vm90, %v2037, %v2036
    %v2039 = vrot.slane %v2004, 4
    %v2040 = vsel %vm93, %v2039, %v2038
    %v2041 = vrot.slane %v2005, 3
    %v2042 = vsel %vm96, %v2041, %v2040
    %v2043 = vrot.slane %v2006, 2
    %v2044 = vsel %vm99, %v2043, %v2042
    %v2045 = vrot.slane %v2007, 1
    %v2046 = vsel %vm102, %v2045, %v2044
    %v2047 = vsel %vm104, %v2046, 0
    %v2050 = vsel %vm107, %v2024, 0
    %2052 = vmatprep.subr.mxu0 0.0
    %2053 = vmatpush1.msra.mxu0 %v2009
    %2054 = vmatprep.subr.mxu0 0.0
    %2055 = vmatpush1.msra.mxu0 %v2010
    %2056 = vmatprep.subr.mxu0 0.0
    %2057 = vmatpush1.msra.mxu0 %v2011
    %2058 = vmatprep.subr.mxu0 0.0
    %2059 = vmatpush1.msra.mxu0 %v2012
    %2060 = vmatprep.subr.mxu0 0.0
    %2061 = vmatpush1.msra.mxu0 %v2013
    %2062 = vmatprep.subr.mxu0 0.0
    %2063 = vmatpush1.msra.mxu0 %v2014
    %2064 = vmatprep.subr.mxu0 0.0
    %2065 = vmatpush1.msra.mxu0 %v2015
    %2066 = vmatprep.subr.mxu0 0.0
    %2067 = vmatpush1.msra.mxu0 %v2016
    %2068 = vmatprep.subr.mxu0 0.0
    %2069 = vmatpush1.msra.mxu0 %v2017
    %2070 = vmatprep.subr.mxu0 0.0
    %2071 = vmatpush1.msra.mxu0 %v2018
    %2072 = vmatprep.subr.mxu0 0.0
    %2073 = vmatpush1.msra.mxu0 %v2019
    %2074 = vmatprep.subr.mxu0 0.0
    %2075 = vmatpush1.msra.mxu0 %v2020
    %2076 = vmatprep.subr.mxu0 0.0
    %2077 = vmatpush1.msra.mxu0 %v2021
    %2078 = vmatprep.subr.mxu0 0.0
    %2079 = vmatpush1.msra.mxu0 %v2022
    %2080 = vmatprep.subr.mxu0 0.0
    %2081 = vmatpush1.msra.mxu0 %v2023
    %2082 = vmatprep.subr.mxu0 0.0
    %2083 = vmatpush1.msra.mxu0 %v2050
    %2084 = vmatprep.subr.mxu0 0.0
    %2085 = vmatpush1.msra.mxu0 0.0
    %2086 = vmatprep.subr.mxu0 0.0
    %2087 = vmatpush1.msra.mxu0 0.0
    %2088 = vmatprep.subr.mxu0 0.0
    %2089 = vmatpush1.msra.mxu0 0.0
    %2090 = vmatprep.subr.mxu0 0.0
    %2091 = vmatpush1.msra.mxu0 0.0
    %2092 = vmatprep.subr.mxu0 0.0
    %2093 = vmatpush1.msra.mxu0 0.0
    %2094 = vmatprep.subr.mxu0 0.0
    %2095 = vmatpush1.msra.mxu0 0.0
    %2096 = vmatprep.subr.mxu0 0.0
    %2097 = vmatpush1.msra.mxu0 0.0
    %2098 = vmatprep.subr.mxu0 0.0
    %2099 = vmatpush1.msra.mxu0 0.0
    %2100 = vmatprep.subr.mxu0 0.0
    %2101 = vmatpush1.msra.mxu0 0.0
    %2102 = vmatprep.subr.mxu0 0.0
    %2103 = vmatpush1.msra.mxu0 0.0
    %2104 = vmatprep.subr.mxu0 0.0
    %2105 = vmatpush1.msra.mxu0 0.0
    %2106 = vmatprep.subr.mxu0 0.0
    %2107 = vmatpush1.msra.mxu0 0.0
    %2108 = vmatprep.subr.mxu0 0.0
    %2109 = vmatpush1.msra.mxu0 0.0
    %2110 = vmatprep.subr.mxu0 0.0
    %2111 = vmatpush1.msra.mxu0 0.0
    %2112 = vmatprep.subr.mxu0 0.0
    %2113 = vmatpush1.msra.mxu0 0.0
    %2114 = vmatprep.subr.mxu0 0.0
    %2115 = vmatpush1.msra.mxu0 0.0
    %2116 = vmatprep.mubr.f32.mxu0 0.0
    %2117 = vmatmul.mubr.f32.gmra.mrb[0].mxu0 %v2047
    %v2118 = vpop.f32.mrb[0].mxu0
    %v2119 = vadd.f32 0.0, %v2118
    %v2120 = vpop.f32.mrb[0].mxu0
    %2121 = vdwg.mxu0
    %v2122 = vadd.f32 %v1999, %v2119
    %v2123 = vld [vmem:[%s0 + $0x11] sm:$0x1]
    %v2124 = vld [vmem:[%s0 + $0x29] sm:$0x1]
    %v2125 = vld [vmem:[%s0 + $0x41] sm:$0x1]
    %v2126 = vld [vmem:[%s0 + $0x59] sm:$0x1]
    %v2127 = vld [vmem:[%s0 + $0x71] sm:$0x1]
    %v2128 = vld [vmem:[%s0 + $0x89] sm:$0x1]
    %v2129 = vld [vmem:[%s0 + $0xa1] sm:$0x1]
    %v2130 = vld [vmem:[%s0 + $0xb9] sm:$0x1]
    %s2131 = scalar_lea.vmem %s1, 2176
    %v2132 = vld [vmem:[%s2131] sm:$0xff]
    %v2133 = vld [vmem:[%s2131 + $0x8] sm:$0xff]
    %v2134 = vld [vmem:[%s2131 + $0x10] sm:$0xff]
    %v2135 = vld [vmem:[%s2131 + $0x18] sm:$0xff]
    %v2136 = vld [vmem:[%s2131 + $0x20] sm:$0xff]
    %v2137 = vld [vmem:[%s2131 + $0x28] sm:$0xff]
    %v2138 = vld [vmem:[%s2131 + $0x30] sm:$0xff]
    %v2139 = vld [vmem:[%s2131 + $0x38] sm:$0xff]
    %v2140 = vld [vmem:[%s2131 + $0x40] sm:$0xff]
    %v2141 = vld [vmem:[%s2131 + $0x48] sm:$0xff]
    %v2142 = vld [vmem:[%s2131 + $0x50] sm:$0xff]
    %v2143 = vld [vmem:[%s2131 + $0x58] sm:$0xff]
    %v2144 = vld [vmem:[%s2131 + $0x60] sm:$0xff]
    %v2145 = vld [vmem:[%s2131 + $0x68] sm:$0xff]
    %v2146 = vld [vmem:[%s2131 + $0x70] sm:$0xff]
    %v2147 = vld [vmem:[%s2131 + $0x78] sm:$0xf]
    %v2156 = vrot.slane %v2124, 7
    %v2157 = vsel %vm84, %v2156, %v2123
    %v2158 = vrot.slane %v2125, 6
    %v2159 = vsel %vm87, %v2158, %v2157
    %v2160 = vrot.slane %v2126, 5
    %v2161 = vsel %vm90, %v2160, %v2159
    %v2162 = vrot.slane %v2127, 4
    %v2163 = vsel %vm93, %v2162, %v2161
    %v2164 = vrot.slane %v2128, 3
    %v2165 = vsel %vm96, %v2164, %v2163
    %v2166 = vrot.slane %v2129, 2
    %v2167 = vsel %vm99, %v2166, %v2165
    %v2168 = vrot.slane %v2130, 1
    %v2169 = vsel %vm102, %v2168, %v2167
    %v2170 = vsel %vm104, %v2169, 0
    %v2173 = vsel %vm107, %v2147, 0
    %2175 = vmatprep.subr.mxu0 0.0
    %2176 = vmatpush1.msra.mxu0 %v2132
    %2177 = vmatprep.subr.mxu0 0.0
    %2178 = vmatpush1.msra.mxu0 %v2133
    %2179 = vmatprep.subr.mxu0 0.0
    %2180 = vmatpush1.msra.mxu0 %v2134
    %2181 = vmatprep.subr.mxu0 0.0
    %2182 = vmatpush1.msra.mxu0 %v2135
    %2183 = vmatprep.subr.mxu0 0.0
    %2184 = vmatpush1.msra.mxu0 %v2136
    %2185 = vmatprep.subr.mxu0 0.0
    %2186 = vmatpush1.msra.mxu0 %v2137
    %2187 = vmatprep.subr.mxu0 0.0
    %2188 = vmatpush1.msra.mxu0 %v2138
    %2189 = vmatprep.subr.mxu0 0.0
    %2190 = vmatpush1.msra.mxu0 %v2139
    %2191 = vmatprep.subr.mxu0 0.0
    %2192 = vmatpush1.msra.mxu0 %v2140
    %2193 = vmatprep.subr.mxu0 0.0
    %2194 = vmatpush1.msra.mxu0 %v2141
    %2195 = vmatprep.subr.mxu0 0.0
    %2196 = vmatpush1.msra.mxu0 %v2142
    %2197 = vmatprep.subr.mxu0 0.0
    %2198 = vmatpush1.msra.mxu0 %v2143
    %2199 = vmatprep.subr.mxu0 0.0
    %2200 = vmatpush1.msra.mxu0 %v2144
    %2201 = vmatprep.subr.mxu0 0.0
    %2202 = vmatpush1.msra.mxu0 %v2145
    %2203 = vmatprep.subr.mxu0 0.0
    %2204 = vmatpush1.msra.mxu0 %v2146
    %2205 = vmatprep.subr.mxu0 0.0
    %2206 = vmatpush1.msra.mxu0 %v2173
    %2207 = vmatprep.subr.mxu0 0.0
    %2208 = vmatpush1.msra.mxu0 0.0
    %2209 = vmatprep.subr.mxu0 0.0
    %2210 = vmatpush1.msra.mxu0 0.0
    %2211 = vmatprep.subr.mxu0 0.0
    %2212 = vmatpush1.msra.mxu0 0.0
    %2213 = vmatprep.subr.mxu0 0.0
    %2214 = vmatpush1.msra.mxu0 0.0
    %2215 = vmatprep.subr.mxu0 0.0
    %2216 = vmatpush1.msra.mxu0 0.0
    %2217 = vmatprep.subr.mxu0 0.0
    %2218 = vmatpush1.msra.mxu0 0.0
    %2219 = vmatprep.subr.mxu0 0.0
    %2220 = vmatpush1.msra.mxu0 0.0
    %2221 = vmatprep.subr.mxu0 0.0
    %2222 = vmatpush1.msra.mxu0 0.0
    %2223 = vmatprep.subr.mxu0 0.0
    %2224 = vmatpush1.msra.mxu0 0.0
    %2225 = vmatprep.subr.mxu0 0.0
    %2226 = vmatpush1.msra.mxu0 0.0
    %2227 = vmatprep.subr.mxu0 0.0
    %2228 = vmatpush1.msra.mxu0 0.0
    %2229 = vmatprep.subr.mxu0 0.0
    %2230 = vmatpush1.msra.mxu0 0.0
    %2231 = vmatprep.subr.mxu0 0.0
    %2232 = vmatpush1.msra.mxu0 0.0
    %2233 = vmatprep.subr.mxu0 0.0
    %2234 = vmatpush1.msra.mxu0 0.0
    %2235 = vmatprep.subr.mxu0 0.0
    %2236 = vmatpush1.msra.mxu0 0.0
    %2237 = vmatprep.subr.mxu0 0.0
    %2238 = vmatpush1.msra.mxu0 0.0
    %2239 = vmatprep.mubr.f32.mxu0 0.0
    %2240 = vmatmul.mubr.f32.gmra.mrb[0].mxu0 %v2170
    %v2241 = vpop.f32.mrb[0].mxu0
    %v2242 = vadd.f32 0.0, %v2241
    %v2243 = vpop.f32.mrb[0].mxu0
    %2244 = vdwg.mxu0
    %v2245 = vadd.f32 %v2122, %v2242
    %v2246 = vld [vmem:[%s0 + $0x12] sm:$0x1]
    %v2247 = vld [vmem:[%s0 + $0x2a] sm:$0x1]
    %v2248 = vld [vmem:[%s0 + $0x42] sm:$0x1]
    %v2249 = vld [vmem:[%s0 + $0x5a] sm:$0x1]
    %v2250 = vld [vmem:[%s0 + $0x72] sm:$0x1]
    %v2251 = vld [vmem:[%s0 + $0x8a] sm:$0x1]
    %v2252 = vld [vmem:[%s0 + $0xa2] sm:$0x1]
    %v2253 = vld [vmem:[%s0 + $0xba] sm:$0x1]
    %s2254 = scalar_lea.vmem %s1, 2304
    %v2255 = vld [vmem:[%s2254] sm:$0xff]
    %v2256 = vld [vmem:[%s2254 + $0x8] sm:$0xff]
    %v2257 = vld [vmem:[%s2254 + $0x10] sm:$0xff]
    %v2258 = vld [vmem:[%s2254 + $0x18] sm:$0xff]
    %v2259 = vld [vmem:[%s2254 + $0x20] sm:$0xff]
    %v2260 = vld [vmem:[%s2254 + $0x28] sm:$0xff]
    %v2261 = vld [vmem:[%s2254 + $0x30] sm:$0xff]
    %v2262 = vld [vmem:[%s2254 + $0x38] sm:$0xff]
    %v2263 = vld [vmem:[%s2254 + $0x40] sm:$0xff]
    %v2264 = vld [vmem:[%s2254 + $0x48] sm:$0xff]
    %v2265 = vld [vmem:[%s2254 + $0x50] sm:$0xff]
    %v2266 = vld [vmem:[%s2254 + $0x58] sm:$0xff]
    %v2267 = vld [vmem:[%s2254 + $0x60] sm:$0xff]
    %v2268 = vld [vmem:[%s2254 + $0x68] sm:$0xff]
    %v2269 = vld [vmem:[%s2254 + $0x70] sm:$0xff]
    %v2270 = vld [vmem:[%s2254 + $0x78] sm:$0xf]
    %v2279 = vrot.slane %v2247, 7
    %v2280 = vsel %vm84, %v2279, %v2246
    %v2281 = vrot.slane %v2248, 6
    %v2282 = vsel %vm87, %v2281, %v2280
    %v2283 = vrot.slane %v2249, 5
    %v2284 = vsel %vm90, %v2283, %v2282
    %v2285 = vrot.slane %v2250, 4
    %v2286 = vsel %vm93, %v2285, %v2284
    %v2287 = vrot.slane %v2251, 3
    %v2288 = vsel %vm96, %v2287, %v2286
    %v2289 = vrot.slane %v2252, 2
    %v2290 = vsel %vm99, %v2289, %v2288
    %v2291 = vrot.slane %v2253, 1
    %v2292 = vsel %vm102, %v2291, %v2290
    %v2293 = vsel %vm104, %v2292, 0
    %v2296 = vsel %vm107, %v2270, 0
    %2298 = vmatprep.subr.mxu0 0.0
    %2299 = vmatpush1.msra.mxu0 %v2255
    %2300 = vmatprep.subr.mxu0 0.0
    %2301 = vmatpush1.msra.mxu0 %v2256
    %2302 = vmatprep.subr.mxu0 0.0
    %2303 = vmatpush1.msra.mxu0 %v2257
    %2304 = vmatprep.subr.mxu0 0.0
    %2305 = vmatpush1.msra.mxu0 %v2258
    %2306 = vmatprep.subr.mxu0 0.0
    %2307 = vmatpush1.msra.mxu0 %v2259
    %2308 = vmatprep.subr.mxu0 0.0
    %2309 = vmatpush1.msra.mxu0 %v2260
    %2310 = vmatprep.subr.mxu0 0.0
    %2311 = vmatpush1.msra.mxu0 %v2261
    %2312 = vmatprep.subr.mxu0 0.0
    %2313 = vmatpush1.msra.mxu0 %v2262
    %2314 = vmatprep.subr.mxu0 0.0
    %2315 = vmatpush1.msra.mxu0 %v2263
    %2316 = vmatprep.subr.mxu0 0.0
    %2317 = vmatpush1.msra.mxu0 %v2264
    %2318 = vmatprep.subr.mxu0 0.0
    %2319 = vmatpush1.msra.mxu0 %v2265
    %2320 = vmatprep.subr.mxu0 0.0
    %2321 = vmatpush1.msra.mxu0 %v2266
    %2322 = vmatprep.subr.mxu0 0.0
    %2323 = vmatpush1.msra.mxu0 %v2267
    %2324 = vmatprep.subr.mxu0 0.0
    %2325 = vmatpush1.msra.mxu0 %v2268
    %2326 = vmatprep.subr.mxu0 0.0
    %2327 = vmatpush1.msra.mxu0 %v2269
    %2328 = vmatprep.subr.mxu0 0.0
    %2329 = vmatpush1.msra.mxu0 %v2296
    %2330 = vmatprep.subr.mxu0 0.0
    %2331 = vmatpush1.msra.mxu0 0.0
    %2332 = vmatprep.subr.mxu0 0.0
    %2333 = vmatpush1.msra.mxu0 0.0
    %2334 = vmatprep.subr.mxu0 0.0
    %2335 = vmatpush1.msra.mxu0 0.0
    %2336 = vmatprep.subr.mxu0 0.0
    %2337 = vmatpush1.msra.mxu0 0.0
    %2338 = vmatprep.subr.mxu0 0.0
    %2339 = vmatpush1.msra.mxu0 0.0
    %2340 = vmatprep.subr.mxu0 0.0
    %2341 = vmatpush1.msra.mxu0 0.0
    %2342 = vmatprep.subr.mxu0 0.0
    %2343 = vmatpush1.msra.mxu0 0.0
    %2344 = vmatprep.subr.mxu0 0.0
    %2345 = vmatpush1.msra.mxu0 0.0
    %2346 = vmatprep.subr.mxu0 0.0
    %2347 = vmatpush1.msra.mxu0 0.0
    %2348 = vmatprep.subr.mxu0 0.0
    %2349 = vmatpush1.msra.mxu0 0.0
    %2350 = vmatprep.subr.mxu0 0.0
    %2351 = vmatpush1.msra.mxu0 0.0
    %2352 = vmatprep.subr.mxu0 0.0
    %2353 = vmatpush1.msra.mxu0 0.0
    %2354 = vmatprep.subr.mxu0 0.0
    %2355 = vmatpush1.msra.mxu0 0.0
    %2356 = vmatprep.subr.mxu0 0.0
    %2357 = vmatpush1.msra.mxu0 0.0
    %2358 = vmatprep.subr.mxu0 0.0
    %2359 = vmatpush1.msra.mxu0 0.0
    %2360 = vmatprep.subr.mxu0 0.0
    %2361 = vmatpush1.msra.mxu0 0.0
    %2362 = vmatprep.mubr.f32.mxu0 0.0
    %2363 = vmatmul.mubr.f32.gmra.mrb[0].mxu0 %v2293
    %v2364 = vpop.f32.mrb[0].mxu0
    %v2365 = vadd.f32 0.0, %v2364
    %v2366 = vpop.f32.mrb[0].mxu0
    %2367 = vdwg.mxu0
    %v2368 = vadd.f32 %v2245, %v2365
    %v2369 = vld [vmem:[%s0 + $0x13] sm:$0x1]
    %v2370 = vld [vmem:[%s0 + $0x2b] sm:$0x1]
    %v2371 = vld [vmem:[%s0 + $0x43] sm:$0x1]
    %v2372 = vld [vmem:[%s0 + $0x5b] sm:$0x1]
    %v2373 = vld [vmem:[%s0 + $0x73] sm:$0x1]
    %v2374 = vld [vmem:[%s0 + $0x8b] sm:$0x1]
    %v2375 = vld [vmem:[%s0 + $0xa3] sm:$0x1]
    %v2376 = vld [vmem:[%s0 + $0xbb] sm:$0x1]
    %s2377 = scalar_lea.vmem %s1, 2432
    %v2378 = vld [vmem:[%s2377] sm:$0xff]
    %v2379 = vld [vmem:[%s2377 + $0x8] sm:$0xff]
    %v2380 = vld [vmem:[%s2377 + $0x10] sm:$0xff]
    %v2381 = vld [vmem:[%s2377 + $0x18] sm:$0xff]
    %v2382 = vld [vmem:[%s2377 + $0x20] sm:$0xff]
    %v2383 = vld [vmem:[%s2377 + $0x28] sm:$0xff]
    %v2384 = vld [vmem:[%s2377 + $0x30] sm:$0xff]
    %v2385 = vld [vmem:[%s2377 + $0x38] sm:$0xff]
    %v2386 = vld [vmem:[%s2377 + $0x40] sm:$0xff]
    %v2387 = vld [vmem:[%s2377 + $0x48] sm:$0xff]
    %v2388 = vld [vmem:[%s2377 + $0x50] sm:$0xff]
    %v2389 = vld [vmem:[%s2377 + $0x58] sm:$0xff]
    %v2390 = vld [vmem:[%s2377 + $0x60] sm:$0xff]
    %v2391 = vld [vmem:[%s2377 + $0x68] sm:$0xff]
    %v2392 = vld [vmem:[%s2377 + $0x70] sm:$0xff]
    %v2393 = vld [vmem:[%s2377 + $0x78] sm:$0xf]
    %v2402 = vrot.slane %v2370, 7
    %v2403 = vsel %vm84, %v2402, %v2369
    %v2404 = vrot.slane %v2371, 6
    %v2405 = vsel %vm87, %v2404, %v2403
    %v2406 = vrot.slane %v2372, 5
    %v2407 = vsel %vm90, %v2406, %v2405
    %v2408 = vrot.slane %v2373, 4
    %v2409 = vsel %vm93, %v2408, %v2407
    %v2410 = vrot.slane %v2374, 3
    %v2411 = vsel %vm96, %v2410, %v2409
    %v2412 = vrot.slane %v2375, 2
    %v2413 = vsel %vm99, %v2412, %v2411
    %v2414 = vrot.slane %v2376, 1
    %v2415 = vsel %vm102, %v2414, %v2413
    %v2416 = vsel %vm104, %v2415, 0
    %v2419 = vsel %vm107, %v2393, 0
    %2421 = vmatprep.subr.mxu0 0.0
    %2422 = vmatpush1.msra.mxu0 %v2378
    %2423 = vmatprep.subr.mxu0 0.0
    %2424 = vmatpush1.msra.mxu0 %v2379
    %2425 = vmatprep.subr.mxu0 0.0
    %2426 = vmatpush1.msra.mxu0 %v2380
    %2427 = vmatprep.subr.mxu0 0.0
    %2428 = vmatpush1.msra.mxu0 %v2381
    %2429 = vmatprep.subr.mxu0 0.0
    %2430 = vmatpush1.msra.mxu0 %v2382
    %2431 = vmatprep.subr.mxu0 0.0
    %2432 = vmatpush1.msra.mxu0 %v2383
    %2433 = vmatprep.subr.mxu0 0.0
    %2434 = vmatpush1.msra.mxu0 %v2384
    %2435 = vmatprep.subr.mxu0 0.0
    %2436 = vmatpush1.msra.mxu0 %v2385
    %2437 = vmatprep.subr.mxu0 0.0
    %2438 = vmatpush1.msra.mxu0 %v2386
    %2439 = vmatprep.subr.mxu0 0.0
    %2440 = vmatpush1.msra.mxu0 %v2387
    %2441 = vmatprep.subr.mxu0 0.0
    %2442 = vmatpush1.msra.mxu0 %v2388
    %2443 = vmatprep.subr.mxu0 0.0
    %2444 = vmatpush1.msra.mxu0 %v2389
    %2445 = vmatprep.subr.mxu0 0.0
    %2446 = vmatpush1.msra.mxu0 %v2390
    %2447 = vmatprep.subr.mxu0 0.0
    %2448 = vmatpush1.msra.mxu0 %v2391
    %2449 = vmatprep.subr.mxu0 0.0
    %2450 = vmatpush1.msra.mxu0 %v2392
    %2451 = vmatprep.subr.mxu0 0.0
    %2452 = vmatpush1.msra.mxu0 %v2419
    %2453 = vmatprep.subr.mxu0 0.0
    %2454 = vmatpush1.msra.mxu0 0.0
    %2455 = vmatprep.subr.mxu0 0.0
    %2456 = vmatpush1.msra.mxu0 0.0
    %2457 = vmatprep.subr.mxu0 0.0
    %2458 = vmatpush1.msra.mxu0 0.0
    %2459 = vmatprep.subr.mxu0 0.0
    %2460 = vmatpush1.msra.mxu0 0.0
    %2461 = vmatprep.subr.mxu0 0.0
    %2462 = vmatpush1.msra.mxu0 0.0
    %2463 = vmatprep.subr.mxu0 0.0
    %2464 = vmatpush1.msra.mxu0 0.0
    %2465 = vmatprep.subr.mxu0 0.0
    %2466 = vmatpush1.msra.mxu0 0.0
    %2467 = vmatprep.subr.mxu0 0.0
    %2468 = vmatpush1.msra.mxu0 0.0
    %2469 = vmatprep.subr.mxu0 0.0
    %2470 = vmatpush1.msra.mxu0 0.0
    %2471 = vmatprep.subr.mxu0 0.0
    %2472 = vmatpush1.msra.mxu0 0.0
    %2473 = vmatprep.subr.mxu0 0.0
    %2474 = vmatpush1.msra.mxu0 0.0
    %2475 = vmatprep.subr.mxu0 0.0
    %2476 = vmatpush1.msra.mxu0 0.0
    %2477 = vmatprep.subr.mxu0 0.0
    %2478 = vmatpush1.msra.mxu0 0.0
    %2479 = vmatprep.subr.mxu0 0.0
    %2480 = vmatpush1.msra.mxu0 0.0
    %2481 = vmatprep.subr.mxu0 0.0
    %2482 = vmatpush1.msra.mxu0 0.0
    %2483 = vmatprep.subr.mxu0 0.0
    %2484 = vmatpush1.msra.mxu0 0.0
    %2485 = vmatprep.mubr.f32.mxu0 0.0
    %2486 = vmatmul.mubr.f32.gmra.mrb[0].mxu0 %v2416
    %v2487 = vpop.f32.mrb[0].mxu0
    %v2488 = vadd.f32 0.0, %v2487
    %v2489 = vpop.f32.mrb[0].mxu0
    %2490 = vdwg.mxu0
    %v2491 = vadd.f32 %v2368, %v2488
    %v2492 = vld [vmem:[%s2] sm:$0x1]
    %v2494 = vlaneseq
    %v2495 = vshrl.u32 %v2494, 7
    %v2496 = vsub.s32 0, %v2495
    %v2497 = vrot.slane %v2492, %v2496
    %v2499 = vadd.f32 %v2491, %v2497
    %v2500 = vmax.f32 %v2499, 0.0
    %v2501 = vld [vmem:[%s3] sm:$0xff]
    %v2502 = vld [vmem:[%s3 + $0x8] sm:$0xff]
    %v2503 = vld [vmem:[%s3 + $0x10] sm:$0xff]
    %v2504 = vld [vmem:[%s3 + $0x18] sm:$0xff]
    %v2505 = vld [vmem:[%s4] sm:$0x1]
    %v2507 = vlaneseq
    %v2508 = vshrl.u32 %v2507, 7
    %v2509 = vsub.s32 0, %v2508
    %v2510 = vrot.slane %v2505, %v2509
    %vm2512 = vcmask 261120
    %v2514 = vsel %vm2512, %v2500, 0
    %2516 = vmatprep.subr.mxu0 0.0
    %2517 = vmatpush1.msra.mxu0 %v2501
    %2518 = vmatprep.subr.mxu0 0.0
    %2519 = vmatpush1.msra.mxu0 %v2502
    %2520 = vmatprep.subr.mxu0 0.0
    %2521 = vmatpush1.msra.mxu0 %v2503
    %2522 = vmatprep.subr.mxu0 0.0
    %2523 = vmatpush1.msra.mxu0 %v2504
    %2524 = vmatprep.subr.mxu0 0.0
    %2525 = vmatpush1.msra.mxu0 0.0
    %2526 = vmatprep.subr.mxu0 0.0
    %2527 = vmatpush1.msra.mxu0 0.0
    %2528 = vmatprep.subr.mxu0 0.0
    %2529 = vmatpush1.msra.mxu0 0.0
    %2530 = vmatprep.subr.mxu0 0.0
    %2531 = vmatpush1.msra.mxu0 0.0
    %2532 = vmatprep.subr.mxu0 0.0
    %2533 = vmatpush1.msra.mxu0 0.0
    %2534 = vmatprep.subr.mxu0 0.0
    %2535 = vmatpush1.msra.mxu0 0.0
    %2536 = vmatprep.subr.mxu0 0.0
    %2537 = vmatpush1.msra.mxu0 0.0
    %2538 = vmatprep.subr.mxu0 0.0
    %2539 = vmatpush1.msra.mxu0 0.0
    %2540 = vmatprep.subr.mxu0 0.0
    %2541 = vmatpush1.msra.mxu0 0.0
    %2542 = vmatprep.subr.mxu0 0.0
    %2543 = vmatpush1.msra.mxu0 0.0
    %2544 = vmatprep.subr.mxu0 0.0
    %2545 = vmatpush1.msra.mxu0 0.0
    %2546 = vmatprep.subr.mxu0 0.0
    %2547 = vmatpush1.msra.mxu0 0.0
    %2548 = vmatprep.subr.mxu0 0.0
    %2549 = vmatpush1.msra.mxu0 0.0
    %2550 = vmatprep.subr.mxu0 0.0
    %2551 = vmatpush1.msra.mxu0 0.0
    %2552 = vmatprep.subr.mxu0 0.0
    %2553 = vmatpush1.msra.mxu0 0.0
    %2554 = vmatprep.subr.mxu0 0.0
    %2555 = vmatpush1.msra.mxu0 0.0
    %2556 = vmatprep.subr.mxu0 0.0
    %2557 = vmatpush1.msra.mxu0 0.0
    %2558 = vmatprep.subr.mxu0 0.0
    %2559 = vmatpush1.msra.mxu0 0.0
    %2560 = vmatprep.subr.mxu0 0.0
    %2561 = vmatpush1.msra.mxu0 0.0
    %2562 = vmatprep.subr.mxu0 0.0
    %2563 = vmatpush1.msra.mxu0 0.0
    %2564 = vmatprep.subr.mxu0 0.0
    %2565 = vmatpush1.msra.mxu0 0.0
    %2566 = vmatprep.subr.mxu0 0.0
    %2567 = vmatpush1.msra.mxu0 0.0
    %2568 = vmatprep.subr.mxu0 0.0
    %2569 = vmatpush1.msra.mxu0 0.0
    %2570 = vmatprep.subr.mxu0 0.0
    %2571 = vmatpush1.msra.mxu0 0.0
    %2572 = vmatprep.subr.mxu0 0.0
    %2573 = vmatpush1.msra.mxu0 0.0
    %2574 = vmatprep.subr.mxu0 0.0
    %2575 = vmatpush1.msra.mxu0 0.0
    %2576 = vmatprep.subr.mxu0 0.0
    %2577 = vmatpush1.msra.mxu0 0.0
    %2578 = vmatprep.subr.mxu0 0.0
    %2579 = vmatpush1.msra.mxu0 0.0
    %2580 = vmatprep.mubr.f32.mxu0 0.0
    %2581 = vmatmul.mubr.f32.gmra.mrb[0].mxu0 %v2514
    %v2582 = vpop.f32.mrb[0].mxu0
    %v2583 = vadd.f32 %v2510, %v2582
    %v2584 = vpop.f32.mrb[0].mxu0
    %2585 = vdwg.mxu0
    %v2586 = vmax.f32 %v2583, 0.0
    %v2587 = vld [vmem:[%s5] sm:$0xff]
    %v2588 = vld [vmem:[%s5 + $0x8] sm:$0xff]
    %v2589 = vld [vmem:[%s6] sm:$0x1]
    %v2591 = vlaneseq
    %v2592 = vshrl.u32 %v2591, 7
    %v2593 = vsub.s32 0, %v2592
    %v2594 = vrot.slane %v2589, %v2593
    %vm2596 = vcmask 130048
    %v2598 = vsel %vm2596, %v2586, 0
    %2600 = vmatprep.subr.mxu0 0.0
    %2601 = vmatpush1.msra.mxu0 %v2587
    %2602 = vmatprep.subr.mxu0 0.0
    %2603 = vmatpush1.msra.mxu0 %v2588
    %2604 = vmatprep.subr.mxu0 0.0
    %2605 = vmatpush1.msra.mxu0 0.0
    %2606 = vmatprep.subr.mxu0 0.0
    %2607 = vmatpush1.msra.mxu0 0.0
    %2608 = vmatprep.subr.mxu0 0.0
    %2609 = vmatpush1.msra.mxu0 0.0
    %2610 = vmatprep.subr.mxu0 0.0
    %2611 = vmatpush1.msra.mxu0 0.0
    %2612 = vmatprep.subr.mxu0 0.0
    %2613 = vmatpush1.msra.mxu0 0.0
    %2614 = vmatprep.subr.mxu0 0.0
    %2615 = vmatpush1.msra.mxu0 0.0
    %2616 = vmatprep.subr.mxu0 0.0
    %2617 = vmatpush1.msra.mxu0 0.0
    %2618 = vmatprep.subr.mxu0 0.0
    %2619 = vmatpush1.msra.mxu0 0.0
    %2620 = vmatprep.subr.mxu0 0.0
    %2621 = vmatpush1.msra.mxu0 0.0
    %2622 = vmatprep.subr.mxu0 0.0
    %2623 = vmatpush1.msra.mxu0 0.0
    %2624 = vmatprep.subr.mxu0 0.0
    %2625 = vmatpush1.msra.mxu0 0.0
    %2626 = vmatprep.subr.mxu0 0.0
    %2627 = vmatpush1.msra.mxu0 0.0
    %2628 = vmatprep.subr.mxu0 0.0
    %2629 = vmatpush1.msra.mxu0 0.0
    %2630 = vmatprep.subr.mxu0 0.0
    %2631 = vmatpush1.msra.mxu0 0.0
    %2632 = vmatprep.subr.mxu0 0.0
    %2633 = vmatpush1.msra.mxu0 0.0
    %2634 = vmatprep.subr.mxu0 0.0
    %2635 = vmatpush1.msra.mxu0 0.0
    %2636 = vmatprep.subr.mxu0 0.0
    %2637 = vmatpush1.msra.mxu0 0.0
    %2638 = vmatprep.subr.mxu0 0.0
    %2639 = vmatpush1.msra.mxu0 0.0
    %2640 = vmatprep.subr.mxu0 0.0
    %2641 = vmatpush1.msra.mxu0 0.0
    %2642 = vmatprep.subr.mxu0 0.0
    %2643 = vmatpush1.msra.mxu0 0.0
    %2644 = vmatprep.subr.mxu0 0.0
    %2645 = vmatpush1.msra.mxu0 0.0
    %2646 = vmatprep.subr.mxu0 0.0
    %2647 = vmatpush1.msra.mxu0 0.0
    %2648 = vmatprep.subr.mxu0 0.0
    %2649 = vmatpush1.msra.mxu0 0.0
    %2650 = vmatprep.subr.mxu0 0.0
    %2651 = vmatpush1.msra.mxu0 0.0
    %2652 = vmatprep.subr.mxu0 0.0
    %2653 = vmatpush1.msra.mxu0 0.0
    %2654 = vmatprep.subr.mxu0 0.0
    %2655 = vmatpush1.msra.mxu0 0.0
    %2656 = vmatprep.subr.mxu0 0.0
    %2657 = vmatpush1.msra.mxu0 0.0
    %2658 = vmatprep.subr.mxu0 0.0
    %2659 = vmatpush1.msra.mxu0 0.0
    %2660 = vmatprep.subr.mxu0 0.0
    %2661 = vmatpush1.msra.mxu0 0.0
    %2662 = vmatprep.subr.mxu0 0.0
    %2663 = vmatpush1.msra.mxu0 0.0
    %2664 = vmatprep.mubr.f32.mxu0 0.0
    %2665 = vmatmul.mubr.f32.gmra.mrb[0].mxu0 %v2598
    %v2666 = vpop.f32.mrb[0].mxu0
    %v2667 = vadd.f32 %v2594, %v2666
    %v2668 = vpop.f32.mrb[0].mxu0
    %2669 = vdwg.mxu0
    %vm2670 = vcmask 64512
    %2671 = vst.msk [vmem:[#allocation2] sm:$0xff] %vm2670, %v2667
    // Predicated region
    $region30: #{custom_model_forward.1} parent=1 // pred_check
      _
    $region31: #{custom_model_forward.1} parent=1 // pred_check_branch
      %2673 = sbr.rel (0) target = $region33
    $region32: #{custom_model_forward.1} parent=1 // pred_region
      // Predicated region
      $region34: #{custom_model_forward.1} parent=32 // pred_check
        _
      $region35: #{custom_model_forward.1} parent=32 // pred_check_branch
        %2675 = sbr.rel (0) target = $region37
      $region36: #{custom_model_forward.1} parent=32 // pred_region
        // Predicated region
        $region38: #{custom_model_forward.1} parent=36 // pred_check
          _
        $region39: #{custom_model_forward.1} parent=36 // pred_check_branch
          %2677 = sbr.rel target = $region41
        $region40: #{custom_model_forward.1} parent=36 // pred_region
          // Predicated region
          $region53: #{custom_model_forward.1} parent=40 // pred_check
            _
          $region54: #{custom_model_forward.1} parent=40 // pred_check_branch
            %2692 = sbr.rel (0) target = $region56
          $region55: #{custom_model_forward.1} parent=40 // pred_region
            loop: start=0, step=1, limit=1
            $region57: #{custom_model_forward.1} parent=55 // loop_pre_header
              _
            $region58: #{custom_model_forward.1} parent=55 // loop_header
              %s2695 = sphi 0, %s2699
              %p2696 = scmp.ge.s32.totalorder %s2695, 1
              %s2700 = sphi [#allocation2], [#allocation2]
              %s2701 = sphi %s7, %s7
            $region59: #{custom_model_forward.1} parent=55 // loop_header_branch
              %2698 = sbr.rel (%p2696) target = $region63
            $region60: #{custom_model_forward.1} parent=55 // loop_body
              %v2702 = vld [vmem:[%s2700] sm:$0x3]
              %2703 = vst [vmem:[%s2701] sm:$0x3] %v2702
            $region61: #{custom_model_forward.1} parent=55 // loop_footer
              %s2699 = sadd.s32 1, %s2695
            $region62: #{custom_model_forward.1} parent=55 // loop_footer_branch
              %2694 = sbr.rel target = $region58
            $region63: #{custom_model_forward.1} parent=55 // loop_exit
              _
          $region56: #{custom_model_forward.1} parent=40 // pred_fallthru
            _
        $region41: #{custom_model_forward.1} parent=36 // pred_fallthru
          _
        // Predicated region
        $region42: #{custom_model_forward.1} parent=36 // pred_check
          _
        $region43: #{custom_model_forward.1} parent=36 // pred_check_branch
          %2679 = sbr.rel (0) target = $region45
        $region44: #{custom_model_forward.1} parent=36 // pred_region
          loop: start=0, step=1, limit=1
          $region46: #{custom_model_forward.1} parent=44 // loop_pre_header
            _
          $region47: #{custom_model_forward.1} parent=44 // loop_header
            %s2682 = sphi 0, %s2686
            %p2683 = scmp.ge.s32.totalorder %s2682, 1
            %s2687 = sphi [#allocation2], [#allocation2]
            %s2688 = sphi %s7, %s7
          $region48: #{custom_model_forward.1} parent=44 // loop_header_branch
            %2685 = sbr.rel (%p2683) target = $region52
          $region49: #{custom_model_forward.1} parent=44 // loop_body
            %v2689 = vld [vmem:[%s2687] sm:$0x3]
            %2690 = vst [vmem:[%s2688] sm:$0x3] %v2689
          $region50: #{custom_model_forward.1} parent=44 // loop_footer
            %s2686 = sadd.s32 1, %s2682
          $region51: #{custom_model_forward.1} parent=44 // loop_footer_branch
            %2681 = sbr.rel target = $region47
          $region52: #{custom_model_forward.1} parent=44 // loop_exit
            _
        $region45: #{custom_model_forward.1} parent=36 // pred_fallthru
          _
      $region37: #{custom_model_forward.1} parent=32 // pred_fallthru
        _
      %2704 = vnop
    $region33: #{custom_model_forward.1} parent=1 // pred_fallthru
      _
    // Predicated region
    $region64: #{custom_model_forward.1} parent=1 // pred_check
      _
    $region65: #{custom_model_forward.1} parent=1 // pred_check_branch
      %2706 = sbr.rel (0) target = $region67
    $region66: #{custom_model_forward.1} parent=1 // pred_region
      _
    $region67: #{custom_model_forward.1} parent=1 // pred_fallthru
      _

</llo_original>
